<compile_context>
chip_gen: v7x
topology: tpu7x:2x2x1
jax: 0.10.0
libtpu: 0.0.40
codegen_flags: <defaults>
</compile_context>

<pallas_src>
import functools

import jax
import jax.numpy as jnp
from jax.experimental import pallas as pl
from jax.experimental.pallas import tpu as pltpu  # noqa: F401  (kept for completeness)


def _log_softmax(x):
    m = jnp.max(x, axis=-1, keepdims=True)
    s = x - m
    return s - jnp.log(jnp.sum(jnp.exp(s), axis=-1, keepdims=True))


# ---------------------------------------------------------------------------
# Single gridless kernel: the whole TimeReasoning forward in one invocation.
# ---------------------------------------------------------------------------
def _time_reasoning_kernel(
        he_ref, hef_ref, ht_ref, el_ref, em_ref,          # sequence inputs (loop part + final)
        v_ref, edge_ref, rmask_ref,                       # graph inputs
        wh_ref, bh_ref, wq_ref, bq_ref, wp_ref, bp_ref,   # stacked [cell0, cell1] params
        wqt_ref, bqt_ref, bo_ref, wd_ref, bd_ref,         # TransCell (wo folded) + decoder
        loss_ref, hout_ref):
    f32 = jnp.float32
    S, B, M = he_ref.shape                 # S = max_len - 1 loop steps
    _, N, H = v_ref.shape
    T = el_ref.shape[-1]
    E = wqt_ref.shape[-1]

    v3 = v_ref[...]                                   # (B, N, H)
    v2 = v3.reshape(B * N, H)

    # ---- hoisted, loop-invariant projections (computed exactly once per cell) ----
    h0w = (jnp.maximum(jnp.dot(v2, wh_ref[0], preferred_element_type=f32) + bh_ref[0], 0.0)
           * wp_ref[0]).reshape(B, N, M)              # cell0: relu(v@Wh+bh) * wp
    h1w = (jnp.maximum(jnp.dot(v2, wh_ref[1], preferred_element_type=f32) + bh_ref[1], 0.0)
           * wp_ref[1]).reshape(B, N, M)              # cell1 (final step)

    # ---- projections batched over the whole sequence (one matmul each) ----
    qm = jnp.maximum(jnp.dot(he_ref[...].reshape(S * B, M), wq_ref[0],
                             preferred_element_type=f32) + bq_ref[0], 0.0).reshape(S, B, M)
    qmf = jnp.maximum(jnp.dot(hef_ref[...], wq_ref[1],
                              preferred_element_type=f32) + bq_ref[1], 0.0)          # (B, M)
    coef = (jnp.dot(ht_ref[...].reshape(S * B, M), wqt_ref[...],
                    preferred_element_type=f32) + bqt_ref[...]).reshape(S, B, E)      # (S, B, E)

    # ---- posterior logits, softmax / log-softmax for every step at once ----
    post = jnp.sum(h0w[None] * qm[:, :, None, :], axis=-1) + bp_ref[0]               # (S, B, N)
    postf = jnp.sum(h1w * qmf[:, None, :], axis=-1) + bp_ref[1]                      # (B, N)
    logp = _log_softmax(post)
    p = jnp.exp(logp)                                                                # softmax(post)
    logpf = _log_softmax(postf)
    pf = jnp.exp(logpf)

    # ---- reconstruction: one decoder matmul + BCE-with-logits for all loop steps ----
    h_act = jnp.sum(v3[None] * p[..., None], axis=2)                                 # (S, B, H)
    dec = jnp.dot(h_act.reshape(S * B, H), wd_ref[...],
                  preferred_element_type=f32) + bd_ref[...]                          # (S*B, T)
    obs = el_ref[...].reshape(S * B, T)
    bce = jnp.maximum(dec, 0.0) - dec * obs + jnp.log1p(jnp.exp(-jnp.abs(dec)))
    recon = jnp.mean(bce, axis=-1, keepdims=True).reshape(S, B, 1)                   # (S, B, 1)

    # ---- TransCell prior chain: the only sequential dependence (tiny, statically unrolled) ----
    edge4 = edge_ref[...]                             # (B, N, N, E)
    rmask = rmask_ref[...]                            # (B, N, N)
    bo = bo_ref[0, 0]
    em = em_ref[...]                                  # (S, B, 1)

    prior = jnp.zeros((B, N), f32)                    # z_ (z0 logits == 0)
    state_pre = jnp.zeros((B, N), f32)                # state['z'] logits
    lacc = jnp.zeros((B, 1), f32)                     # per-batch masked loss accumulator
    for s in range(S):
        if s > 0:
            l_fwd = 0.1 * jnp.sum(p[s] * (logp[s] - _log_softmax(prior)),
                                  axis=-1, keepdims=True)                            # (B, 1)
            l_t = recon[s] + l_fwd
        else:
            l_t = recon[s]                            # i == 0: recon only (l_forward unused)
        lacc = lacc + l_t * em[s]

        if s > 0:
            # z_ <- softmax_dim1(mask(<edge, coef> + bo)) @ state_pre
            rel = jnp.sum(edge4 * coef[s][:, None, None, :], axis=-1) + bo           # (B, N, N)
            rel = jnp.where(rmask == 0.0, -1e12, rel)
            mx = jnp.max(rel, axis=1, keepdims=True)  # F.softmax(..., dim=1)
            ex = jnp.exp(rel - mx)
            rel_sm = ex / jnp.sum(ex, axis=1, keepdims=True)
            prior = jnp.sum(rel_sm * state_pre[:, None, :], axis=-1)                 # (B, N)
        # s == 0: state_pre (z0 logits) is all-zeros, so TransCell output is exactly zero.
        state_pre = post[s]

    # ---- final step (cell1): KL term + outputs ----
    l_fwd_fin = 0.1 * jnp.sum(pf * (logpf - _log_softmax(prior)), axis=-1, keepdims=True)  # (B, 1)
    loss_ref[...] = jnp.sum(lacc + l_fwd_fin, axis=0, keepdims=True) * (1.0 / B)           # (1, 1)
    hout_ref[...] = jnp.sum(v3 * pf[:, :, None], axis=1)                                   # (B, H)


# ---------------------------------------------------------------------------
# Wrapper: single gridless pallas_call; everything resident in VMEM.
# ---------------------------------------------------------------------------
def time_reasoning_forward(params, hidden_entity, hidden_trans, object_list,
                           e_mask, e_label, edge, r_mask):
    f32 = jnp.float32
    max_len, B, M = hidden_entity.shape
    assert max_len >= 2, "TimeReasoning forward requires max_len >= 2"
    N, H = object_list.shape[1], object_list.shape[2]
    S = max_len - 1

    # Seq-major slabs for the loop part; final-step entity embedding separately.
    he_loop = hidden_entity[:S].astype(f32)                              # (S, B, M)
    he_fin = hidden_entity[S].astype(f32)                                # (B, M)
    ht_loop = hidden_trans[:S].astype(f32)                               # (S, B, M)
    el_loop = jnp.transpose(e_label[:, :S, :], (1, 0, 2)).astype(f32)    # (S, B, T)
    em_loop = jnp.transpose(e_mask[:, :S], (1, 0))[:, :, None].astype(f32)  # (S, B, 1)

    c0, c1 = params["cell0"], params["cell1"]
    stack = lambda k: jnp.stack([c0[k], c1[k]], axis=0).astype(f32)
    tr, dec = params["trans"], params["decoder"]
    # Fold TransCell linear_out weight into linear_q (free, done once in the wrapper).
    wqt_s = (tr["wq"] * tr["wo"]).astype(f32)                            # (M, E)
    bqt_s = (tr["bq"] * tr["wo"]).astype(f32)                            # (1, E)

    loss, h_out = pl.pallas_call(
        _time_reasoning_kernel,
        out_shape=(jax.ShapeDtypeStruct((1, 1), f32),
                   jax.ShapeDtypeStruct((B, H), f32)),
    )(he_loop, he_fin, ht_loop, el_loop, em_loop,
      object_list.astype(f32), edge.astype(f32), r_mask.astype(f32),
      stack("wh"), stack("bh"), stack("wq"), stack("bq"), stack("wp"), stack("bp"),
      wqt_s, bqt_s, tr["bo"].astype(f32), dec["wd"].astype(f32), dec["bd"].astype(f32))
    return loss[0, 0], h_out


# ---------------------------------------------------------------------------
# Pure-JAX reference (direct port of the PyTorch forward, same surrogate) for validation.
# ---------------------------------------------------------------------------
def time_reasoning_reference(params, hidden_entity, hidden_trans, object_list,
                             e_mask, e_label, edge, r_mask):
    cells = [params["cell0"], params["cell1"]]
    tr, dec = params["trans"], params["decoder"]
    B, max_len = e_mask.shape
    N = object_list.shape[1]

    def cell(p, q, v):
        h_to_q = jax.nn.relu(jnp.einsum("bnh,hm->bnm", v, p["wh"]) + p["bh"])
        q_m = jax.nn.relu(q @ p["wq"] + p["bq"])
        hidden_now = h_to_q * q_m[:, None, :]
        return jnp.sum(hidden_now * p["wp"], axis=-1) + p["bp"][0, 0]        # posterior logits

    def kl_recon(prior_logits, post_logits, obs, v):
        z = jax.nn.log_softmax(post_logits, axis=-1)                         # posterior.sample()
        act = jnp.exp(z)
        l = jnp.sum(act * (jax.nn.log_softmax(post_logits, axis=-1)
                           - jax.nn.log_softmax(prior_logits, axis=-1)), axis=-1)
        h_act = jnp.einsum("bnh,bn->bh", v, act)
        logits = h_act @ dec["wd"] + dec["bd"]
        bce = jnp.maximum(logits, 0.0) - logits * obs + jnp.log1p(jnp.exp(-jnp.abs(logits)))
        return jnp.mean(bce, axis=-1), 0.1 * l

    def trans(q, z_logits):
        coef = (q @ tr["wq"] + tr["bq"]) * tr["wo"]
        rel = jnp.sum(edge * coef[:, None, None, :], axis=-1) + tr["bo"][0, 0]
        rel = jnp.where(r_mask == 0.0, -1e12, rel)
        rel_sm = jax.nn.softmax(rel, axis=1)
        return jnp.einsum("bij,bj->bi", rel_sm, z_logits)

    z_state = jnp.zeros((B, N), jnp.float32)           # state['z'] (z0)
    z_prior = jnp.zeros((B, N), jnp.float32)           # z_
    loss_terms = []
    for i in range(max_len - 1):
        state_pre = z_state
        obs = e_label[:, i, :]
        post = cell(cells[0], hidden_entity[i], object_list)
        recon, l_fwd = kl_recon(z_prior, post, obs, object_list)
        z_prior = trans(hidden_trans[i], state_pre)
        l_t = recon if i == 0 else recon + l_fwd
        loss_terms.append(l_t[:, None])
        z_state = post
    L_t = jnp.concatenate(loss_terms, axis=1) * e_mask[:, :-1]
    post = cell(cells[1], hidden_entity[-1], object_list)
    _, l_fwd = kl_recon(z_prior, post, e_label[:, max_len - 2, :], object_list)
    loss_time = jnp.mean(jnp.sum(L_t, axis=1)) + jnp.mean(l_fwd)
    node = jax.nn.softmax(post, axis=-1)
    h_out = jnp.einsum("bnh,bn->bh", object_list, node)
    return loss_time, h_out


# ---------------------------------------------------------------------------
# Deterministic parameter init (synthetic; no checkpoint)
# ---------------------------------------------------------------------------
def init_params(key, H, M, T, E):
    keys = iter(jax.random.split(key, 32))

    def w(shape, scale=0.1):
        return scale * jax.random.normal(next(keys), shape, jnp.float32)

    def cell():
        # encoder_prior is never used by forward; encoder_back (wb/bb) is dead w.r.t.
        # loss_time / h_out, kept only to mirror the module's parameterization.
        return dict(wh=w((H, M)), bh=w((1, M), 0.01),     # linear_h: hidden -> mid (+ReLU)
                    wq=w((M, M)), bq=w((1, M), 0.01),     # linear_q: mid -> mid (+ReLU)
                    wp=w((1, M)), bp=w((1, 1), 0.01),     # encoder_posterior: mid -> 1
                    wb=w((1, M)), bb=w((1, 1), 0.01))     # encoder_back (unused by outputs)

    return dict(
        cell0=cell(), cell1=cell(),
        trans=dict(wq=w((M, E)), bq=w((1, E), 0.01),      # linear_q: mid -> edge
                   wo=w((1, E)), bo=w((1, 1), 0.01)),     # linear_out: edge -> 1 (dropout off)
        decoder=dict(wd=w((H, T)), bd=w((1, T), 0.01)),   # decoder: hidden -> num_token
    )


if __name__ == "__main__":
    # hidden_size=32, mid_size=16, state_size=num_obj=8, num_token=16, edge_size=8
    H, M, T, E = 32, 16, 16, 8
    B, N, max_len = 2, 8, 4

    key = jax.random.PRNGKey(0)
    kp, k1, k2, k3, k4, k5, k6 = jax.random.split(key, 7)
    params = init_params(kp, H, M, T, E)

    hidden_entity = jax.random.normal(k1, (max_len, B, M), jnp.float32)
    hidden_trans = jax.random.normal(k2, (max_len, B, M), jnp.float32)
    object_list = jax.random.normal(k3, (B, N, H), jnp.float32)
    e_mask = jnp.concatenate([jnp.ones((B, max_len - 1), jnp.float32),
                              jnp.zeros((B, 1), jnp.float32)], axis=1)
    e_label = jax.random.uniform(k4, (B, max_len, T), jnp.float32)
    edge = jax.random.normal(k5, (B, N, N, E), jnp.float32)
    r_mask = (jax.random.uniform(k6, (B, N, N)) > 0.3).astype(jnp.float32)
    # e_s / e_e from the PyTorch signature are unused by forward -> not constructed.

    fwd = jax.jit(functools.partial(time_reasoning_forward, params))
    loss_time, h_out = fwd(hidden_entity, hidden_trans, object_list,
                           e_mask, e_label, edge, r_mask)
    jax.block_until_ready((loss_time, h_out))

    ref = jax.jit(functools.partial(time_reasoning_reference, params))
    ref_loss, ref_hout = ref(hidden_entity, hidden_trans, object_list,
                             e_mask, e_label, edge, r_mask)
    jax.block_until_ready((ref_loss, ref_hout))

    assert loss_time.shape == () and h_out.shape == (B, H)
    assert bool(jnp.isfinite(loss_time)) and bool(jnp.all(jnp.isfinite(h_out)))
    assert bool(jnp.allclose(loss_time, ref_loss, rtol=2e-3, atol=2e-3)), (loss_time, ref_loss)
    assert bool(jnp.allclose(h_out, ref_hout, rtol=2e-3, atol=2e-3))
    print("KERNEL_OK")
</pallas_src>

<mosaic_0001>
module attributes {stable_mosaic.version = 11 : i64} {
  func.func @_time_reasoning_kernel(%arg0: memref<3x2x16xf32, #tpu.memory_space<vmem>>, %arg1: memref<2x16xf32, #tpu.memory_space<vmem>>, %arg2: memref<3x2x16xf32, #tpu.memory_space<vmem>>, %arg3: memref<3x2x16xf32, #tpu.memory_space<vmem>>, %arg4: memref<3x2x1xf32, #tpu.memory_space<vmem>>, %arg5: memref<2x8x32xf32, #tpu.memory_space<vmem>>, %arg6: memref<2x8x8x8xf32, #tpu.memory_space<vmem>>, %arg7: memref<2x8x8xf32, #tpu.memory_space<vmem>>, %arg8: memref<2x32x16xf32, #tpu.memory_space<vmem>>, %arg9: memref<2x1x16xf32, #tpu.memory_space<vmem>>, %arg10: memref<2x16x16xf32, #tpu.memory_space<vmem>>, %arg11: memref<2x1x16xf32, #tpu.memory_space<vmem>>, %arg12: memref<2x1x16xf32, #tpu.memory_space<vmem>>, %arg13: memref<2x1x1xf32, #tpu.memory_space<vmem>>, %arg14: memref<16x8xf32, #tpu.memory_space<vmem>>, %arg15: memref<1x8xf32, #tpu.memory_space<vmem>>, %arg16: memref<1x1xf32, #tpu.memory_space<vmem>>, %arg17: memref<32x16xf32, #tpu.memory_space<vmem>>, %arg18: memref<1x16xf32, #tpu.memory_space<vmem>>, %arg19: memref<1x1xf32, #tpu.memory_space<vmem>>, %arg20: memref<2x32xf32, #tpu.memory_space<vmem>>) attributes {dimension_semantics = [], scalar_prefetch = 0 : i64, scratch_operands = 0 : i64, tpu.core_type = #tpu.core_type<tc>} {
    %c0 = arith.constant 0 : index
    %c0_0 = arith.constant 0 : index
    %c0_1 = arith.constant 0 : index
    %0 = vector.load %arg5[%c0, %c0_0, %c0_1] : memref<2x8x32xf32, #tpu.memory_space<vmem>>, vector<2x8x32xf32>
    %1 = vector.shape_cast %0 : vector<2x8x32xf32> to vector<16x32xf32>
    %c0_2 = arith.constant 0 : index
    %c0_3 = arith.constant 0 : index
    %c0_4 = arith.constant 0 : index
    %2 = vector.load %arg8[%c0_2, %c0_3, %c0_4] : memref<2x32x16xf32, #tpu.memory_space<vmem>>, vector<1x32x16xf32>
    %3 = vector.shape_cast %2 : vector<1x32x16xf32> to vector<32x16xf32>
    %cst = arith.constant dense<0.000000e+00> : vector<16x16xf32>
    %4 = tpu.matmul %1, %3, %cst {dimension_numbers = #tpu.dot_dimension_numbers<[1], [0], [0], [1], [0, 0, 1, 1], [], []>} : vector<16x32xf32>, vector<32x16xf32>, vector<16x16xf32> -> vector<16x16xf32>
    %c0_5 = arith.constant 0 : index
    %c0_6 = arith.constant 0 : index
    %c0_7 = arith.constant 0 : index
    %5 = vector.load %arg9[%c0_5, %c0_6, %c0_7] : memref<2x1x16xf32, #tpu.memory_space<vmem>>, vector<1x1x16xf32>
    %6 = vector.shape_cast %5 : vector<1x1x16xf32> to vector<1x16xf32>
    %7 = vector.broadcast %6 : vector<1x16xf32> to vector<16x16xf32>
    %8 = arith.addf %4, %7 : vector<16x16xf32>
    %cst_8 = arith.constant 0.000000e+00 : f32
    %9 = vector.broadcast %cst_8 : f32 to vector<16x16xf32>
    %10 = arith.maximumf %8, %9 : vector<16x16xf32>
    %c0_9 = arith.constant 0 : index
    %c0_10 = arith.constant 0 : index
    %c0_11 = arith.constant 0 : index
    %11 = vector.load %arg12[%c0_9, %c0_10, %c0_11] : memref<2x1x16xf32, #tpu.memory_space<vmem>>, vector<1x1x16xf32>
    %12 = vector.shape_cast %11 : vector<1x1x16xf32> to vector<1x16xf32>
    %13 = vector.broadcast %12 : vector<1x16xf32> to vector<16x16xf32>
    %14 = arith.mulf %10, %13 : vector<16x16xf32>
    %15 = vector.shape_cast %14 : vector<16x16xf32> to vector<2x8x16xf32>
    %c1 = arith.constant 1 : index
    %c0_12 = arith.constant 0 : index
    %c0_13 = arith.constant 0 : index
    %16 = vector.load %arg8[%c1, %c0_12, %c0_13] : memref<2x32x16xf32, #tpu.memory_space<vmem>>, vector<1x32x16xf32>
    %17 = vector.shape_cast %16 : vector<1x32x16xf32> to vector<32x16xf32>
    %cst_14 = arith.constant dense<0.000000e+00> : vector<16x16xf32>
    %18 = tpu.matmul %1, %17, %cst_14 {dimension_numbers = #tpu.dot_dimension_numbers<[1], [0], [0], [1], [0, 0, 1, 1], [], []>} : vector<16x32xf32>, vector<32x16xf32>, vector<16x16xf32> -> vector<16x16xf32>
    %c1_15 = arith.constant 1 : index
    %c0_16 = arith.constant 0 : index
    %c0_17 = arith.constant 0 : index
    %19 = vector.load %arg9[%c1_15, %c0_16, %c0_17] : memref<2x1x16xf32, #tpu.memory_space<vmem>>, vector<1x1x16xf32>
    %20 = vector.shape_cast %19 : vector<1x1x16xf32> to vector<1x16xf32>
    %21 = vector.broadcast %20 : vector<1x16xf32> to vector<16x16xf32>
    %22 = arith.addf %18, %21 : vector<16x16xf32>
    %cst_18 = arith.constant 0.000000e+00 : f32
    %23 = vector.broadcast %cst_18 : f32 to vector<16x16xf32>
    %24 = arith.maximumf %22, %23 : vector<16x16xf32>
    %c1_19 = arith.constant 1 : index
    %c0_20 = arith.constant 0 : index
    %c0_21 = arith.constant 0 : index
    %25 = vector.load %arg12[%c1_19, %c0_20, %c0_21] : memref<2x1x16xf32, #tpu.memory_space<vmem>>, vector<1x1x16xf32>
    %26 = vector.shape_cast %25 : vector<1x1x16xf32> to vector<1x16xf32>
    %27 = vector.broadcast %26 : vector<1x16xf32> to vector<16x16xf32>
    %28 = arith.mulf %24, %27 : vector<16x16xf32>
    %29 = vector.shape_cast %28 : vector<16x16xf32> to vector<2x8x16xf32>
    %c0_22 = arith.constant 0 : index
    %c0_23 = arith.constant 0 : index
    %c0_24 = arith.constant 0 : index
    %30 = vector.load %arg0[%c0_22, %c0_23, %c0_24] : memref<3x2x16xf32, #tpu.memory_space<vmem>>, vector<3x2x16xf32>
    %31 = vector.shape_cast %30 : vector<3x2x16xf32> to vector<6x16xf32>
    %c0_25 = arith.constant 0 : index
    %c0_26 = arith.constant 0 : index
    %c0_27 = arith.constant 0 : index
    %32 = vector.load %arg10[%c0_25, %c0_26, %c0_27] : memref<2x16x16xf32, #tpu.memory_space<vmem>>, vector<1x16x16xf32>
    %33 = vector.shape_cast %32 : vector<1x16x16xf32> to vector<16x16xf32>
    %cst_28 = arith.constant dense<0.000000e+00> : vector<6x16xf32>
    %34 = tpu.matmul %31, %33, %cst_28 {dimension_numbers = #tpu.dot_dimension_numbers<[1], [0], [0], [1], [0, 0, 1, 1], [], []>} : vector<6x16xf32>, vector<16x16xf32>, vector<6x16xf32> -> vector<6x16xf32>
    %c0_29 = arith.constant 0 : index
    %c0_30 = arith.constant 0 : index
    %c0_31 = arith.constant 0 : index
    %35 = vector.load %arg11[%c0_29, %c0_30, %c0_31] : memref<2x1x16xf32, #tpu.memory_space<vmem>>, vector<1x1x16xf32>
    %36 = vector.shape_cast %35 : vector<1x1x16xf32> to vector<1x16xf32>
    %37 = vector.broadcast %36 : vector<1x16xf32> to vector<6x16xf32>
    %38 = arith.addf %34, %37 : vector<6x16xf32>
    %cst_32 = arith.constant 0.000000e+00 : f32
    %39 = vector.broadcast %cst_32 : f32 to vector<6x16xf32>
    %40 = arith.maximumf %38, %39 : vector<6x16xf32>
    %41 = vector.shape_cast %40 : vector<6x16xf32> to vector<3x2x16xf32>
    %c0_33 = arith.constant 0 : index
    %c0_34 = arith.constant 0 : index
    %42 = vector.load %arg1[%c0_33, %c0_34] : memref<2x16xf32, #tpu.memory_space<vmem>>, vector<2x16xf32>
    %c1_35 = arith.constant 1 : index
    %c0_36 = arith.constant 0 : index
    %c0_37 = arith.constant 0 : index
    %43 = vector.load %arg10[%c1_35, %c0_36, %c0_37] : memref<2x16x16xf32, #tpu.memory_space<vmem>>, vector<1x16x16xf32>
    %44 = vector.shape_cast %43 : vector<1x16x16xf32> to vector<16x16xf32>
    %cst_38 = arith.constant dense<0.000000e+00> : vector<2x16xf32>
    %45 = tpu.matmul %42, %44, %cst_38 {dimension_numbers = #tpu.dot_dimension_numbers<[1], [0], [0], [1], [0, 0, 1, 1], [], []>} : vector<2x16xf32>, vector<16x16xf32>, vector<2x16xf32> -> vector<2x16xf32>
    %c1_39 = arith.constant 1 : index
    %c0_40 = arith.constant 0 : index
    %c0_41 = arith.constant 0 : index
    %46 = vector.load %arg11[%c1_39, %c0_40, %c0_41] : memref<2x1x16xf32, #tpu.memory_space<vmem>>, vector<1x1x16xf32>
    %47 = vector.shape_cast %46 : vector<1x1x16xf32> to vector<1x16xf32>
    %48 = vector.broadcast %47 : vector<1x16xf32> to vector<2x16xf32>
    %49 = arith.addf %45, %48 : vector<2x16xf32>
    %cst_42 = arith.constant 0.000000e+00 : f32
    %50 = vector.broadcast %cst_42 : f32 to vector<2x16xf32>
    %51 = arith.maximumf %49, %50 : vector<2x16xf32>
    %c0_43 = arith.constant 0 : index
    %c0_44 = arith.constant 0 : index
    %c0_45 = arith.constant 0 : index
    %52 = vector.load %arg2[%c0_43, %c0_44, %c0_45] : memref<3x2x16xf32, #tpu.memory_space<vmem>>, vector<3x2x16xf32>
    %53 = vector.shape_cast %52 : vector<3x2x16xf32> to vector<6x16xf32>
    %c0_46 = arith.constant 0 : index
    %c0_47 = arith.constant 0 : index
    %54 = vector.load %arg14[%c0_46, %c0_47] : memref<16x8xf32, #tpu.memory_space<vmem>>, vector<16x8xf32>
    %cst_48 = arith.constant dense<0.000000e+00> : vector<6x8xf32>
    %55 = tpu.matmul %53, %54, %cst_48 {dimension_numbers = #tpu.dot_dimension_numbers<[1], [0], [0], [1], [0, 0, 1, 1], [], []>} : vector<6x16xf32>, vector<16x8xf32>, vector<6x8xf32> -> vector<6x8xf32>
    %c0_49 = arith.constant 0 : index
    %c0_50 = arith.constant 0 : index
    %56 = vector.load %arg15[%c0_49, %c0_50] : memref<1x8xf32, #tpu.memory_space<vmem>>, vector<1x8xf32>
    %57 = vector.broadcast %56 : vector<1x8xf32> to vector<6x8xf32>
    %58 = arith.addf %55, %57 : vector<6x8xf32>
    %59 = vector.shape_cast %58 : vector<6x8xf32> to vector<3x2x8xf32>
    %60 = vector.shape_cast %15 : vector<2x8x16xf32> to vector<1x2x8x16xf32>
    %61 = vector.shape_cast %41 : vector<3x2x16xf32> to vector<3x2x1x16xf32>
    %62 = vector.broadcast %60 : vector<1x2x8x16xf32> to vector<3x2x8x16xf32>
    %63 = vector.broadcast %61 : vector<3x2x1x16xf32> to vector<3x2x8x16xf32>
    %64 = arith.mulf %62, %63 : vector<3x2x8x16xf32>
    %cst_51 = arith.constant dense<0.000000e+00> : vector<3x2x8xf32>
    %65 = vector.multi_reduction <add>, %64, %cst_51 [3] : vector<3x2x8x16xf32> to vector<3x2x8xf32>
    %c0_52 = arith.constant 0 : index
    %c0_53 = arith.constant 0 : index
    %c0_54 = arith.constant 0 : index
    %66 = vector.load %arg13[%c0_52, %c0_53, %c0_54] : memref<2x1x1xf32, #tpu.memory_space<vmem>>, vector<1x1x1xf32>
    %67 = vector.shape_cast %66 : vector<1x1x1xf32> to vector<1x1xf32>
    %68 = vector.shape_cast %67 : vector<1x1xf32> to vector<1x1x1xf32>
    %69 = vector.broadcast %68 : vector<1x1x1xf32> to vector<3x2x8xf32>
    %70 = arith.addf %65, %69 : vector<3x2x8xf32>
    %71 = vector.shape_cast %51 : vector<2x16xf32> to vector<2x1x16xf32>
    %72 = vector.broadcast %71 : vector<2x1x16xf32> to vector<2x8x16xf32>
    %73 = arith.mulf %29, %72 : vector<2x8x16xf32>
    %cst_55 = arith.constant dense<0.000000e+00> : vector<2x8xf32>
    %74 = vector.multi_reduction <add>, %73, %cst_55 [2] : vector<2x8x16xf32> to vector<2x8xf32>
    %c1_56 = arith.constant 1 : index
    %c0_57 = arith.constant 0 : index
    %c0_58 = arith.constant 0 : index
    %75 = vector.load %arg13[%c1_56, %c0_57, %c0_58] : memref<2x1x1xf32, #tpu.memory_space<vmem>>, vector<1x1x1xf32>
    %76 = vector.shape_cast %75 : vector<1x1x1xf32> to vector<1x1xf32>
    %77 = vector.broadcast %76 : vector<1x1xf32> to vector<2x8xf32>
    %78 = arith.addf %74, %77 : vector<2x8xf32>
    %cst_59 = arith.constant dense<0xFF800000> : vector<3x2xf32>
    %79 = vector.multi_reduction <maximumf>, %70, %cst_59 [2] : vector<3x2x8xf32> to vector<3x2xf32>
    %80 = vector.shape_cast %79 : vector<3x2xf32> to vector<3x2x1xf32>
    %81 = vector.broadcast %80 : vector<3x2x1xf32> to vector<3x2x8xf32>
    %82 = arith.subf %70, %81 : vector<3x2x8xf32>
    %83 = math.exp %82 : vector<3x2x8xf32>
    %cst_60 = arith.constant dense<0.000000e+00> : vector<3x2xf32>
    %84 = vector.multi_reduction <add>, %83, %cst_60 [2] : vector<3x2x8xf32> to vector<3x2xf32>
    %85 = vector.shape_cast %84 : vector<3x2xf32> to vector<3x2x1xf32>
    %86 = math.log %85 : vector<3x2x1xf32>
    %87 = vector.broadcast %86 : vector<3x2x1xf32> to vector<3x2x8xf32>
    %88 = arith.subf %82, %87 : vector<3x2x8xf32>
    %89 = math.exp %88 : vector<3x2x8xf32>
    %cst_61 = arith.constant dense<0xFF800000> : vector<2xf32>
    %90 = vector.multi_reduction <maximumf>, %78, %cst_61 [1] : vector<2x8xf32> to vector<2xf32>
    %91 = vector.shape_cast %90 : vector<2xf32> to vector<2x1xf32>
    %92 = vector.broadcast %91 : vector<2x1xf32> to vector<2x8xf32>
    %93 = arith.subf %78, %92 : vector<2x8xf32>
    %94 = math.exp %93 : vector<2x8xf32>
    %cst_62 = arith.constant dense<0.000000e+00> : vector<2xf32>
    %95 = vector.multi_reduction <add>, %94, %cst_62 [1] : vector<2x8xf32> to vector<2xf32>
    %96 = vector.shape_cast %95 : vector<2xf32> to vector<2x1xf32>
    %97 = math.log %96 : vector<2x1xf32>
    %98 = vector.broadcast %97 : vector<2x1xf32> to vector<2x8xf32>
    %99 = arith.subf %93, %98 : vector<2x8xf32>
    %100 = math.exp %99 : vector<2x8xf32>
    %101 = vector.shape_cast %0 : vector<2x8x32xf32> to vector<1x2x8x32xf32>
    %102 = vector.shape_cast %89 : vector<3x2x8xf32> to vector<3x2x8x1xf32>
    %103 = vector.broadcast %101 : vector<1x2x8x32xf32> to vector<3x2x8x32xf32>
    %104 = vector.broadcast %102 : vector<3x2x8x1xf32> to vector<3x2x8x32xf32>
    %105 = arith.mulf %103, %104 : vector<3x2x8x32xf32>
    %cst_63 = arith.constant dense<0.000000e+00> : vector<3x2x32xf32>
    %106 = vector.multi_reduction <add>, %105, %cst_63 [2] : vector<3x2x8x32xf32> to vector<3x2x32xf32>
    %107 = vector.shape_cast %106 : vector<3x2x32xf32> to vector<6x32xf32>
    %c0_64 = arith.constant 0 : index
    %c0_65 = arith.constant 0 : index
    %108 = vector.load %arg17[%c0_64, %c0_65] : memref<32x16xf32, #tpu.memory_space<vmem>>, vector<32x16xf32>
    %cst_66 = arith.constant dense<0.000000e+00> : vector<6x16xf32>
    %109 = tpu.matmul %107, %108, %cst_66 {dimension_numbers = #tpu.dot_dimension_numbers<[1], [0], [0], [1], [0, 0, 1, 1], [], []>} : vector<6x32xf32>, vector<32x16xf32>, vector<6x16xf32> -> vector<6x16xf32>
    %c0_67 = arith.constant 0 : index
    %c0_68 = arith.constant 0 : index
    %110 = vector.load %arg18[%c0_67, %c0_68] : memref<1x16xf32, #tpu.memory_space<vmem>>, vector<1x16xf32>
    %111 = vector.broadcast %110 : vector<1x16xf32> to vector<6x16xf32>
    %112 = arith.addf %109, %111 : vector<6x16xf32>
    %c0_69 = arith.constant 0 : index
    %c0_70 = arith.constant 0 : index
    %c0_71 = arith.constant 0 : index
    %113 = vector.load %arg3[%c0_69, %c0_70, %c0_71] : memref<3x2x16xf32, #tpu.memory_space<vmem>>, vector<3x2x16xf32>
    %114 = vector.shape_cast %113 : vector<3x2x16xf32> to vector<6x16xf32>
    %cst_72 = arith.constant 0.000000e+00 : f32
    %115 = vector.broadcast %cst_72 : f32 to vector<6x16xf32>
    %116 = arith.maximumf %112, %115 : vector<6x16xf32>
    %117 = arith.mulf %112, %114 : vector<6x16xf32>
    %118 = arith.subf %116, %117 : vector<6x16xf32>
    %119 = math.absf %112 : vector<6x16xf32>
    %cst_73 = arith.constant 0.000000e+00 : f32
    %120 = vector.broadcast %cst_73 : f32 to vector<6x16xf32>
    %121 = arith.subf %120, %119 : vector<6x16xf32>
    %122 = math.exp %121 : vector<6x16xf32>
    %123 = math.log1p %122 : vector<6x16xf32>
    %124 = arith.addf %118, %123 : vector<6x16xf32>
    %cst_74 = arith.constant dense<0.000000e+00> : vector<6xf32>
    %125 = vector.multi_reduction <add>, %124, %cst_74 [1] : vector<6x16xf32> to vector<6xf32>
    %126 = vector.shape_cast %125 : vector<6xf32> to vector<6x1xf32>
    %cst_75 = arith.constant 1.600000e+01 : f32
    %127 = vector.broadcast %cst_75 : f32 to vector<6x1xf32>
    %128 = arith.divf %126, %127 : vector<6x1xf32>
    %129 = vector.shape_cast %128 : vector<6x1xf32> to vector<3x2x1xf32>
    %c0_76 = arith.constant 0 : index
    %c0_77 = arith.constant 0 : index
    %c0_78 = arith.constant 0 : index
    %c0_79 = arith.constant 0 : index
    %130 = vector.load %arg6[%c0_76, %c0_77, %c0_78, %c0_79] : memref<2x8x8x8xf32, #tpu.memory_space<vmem>>, vector<2x8x8x8xf32>
    %c0_80 = arith.constant 0 : index
    %c0_81 = arith.constant 0 : index
    %c0_82 = arith.constant 0 : index
    %131 = vector.load %arg7[%c0_80, %c0_81, %c0_82] : memref<2x8x8xf32, #tpu.memory_space<vmem>>, vector<2x8x8xf32>
    %c0_83 = arith.constant 0 : index
    %c0_84 = arith.constant 0 : index
    %132 = vector.load %arg16[%c0_83, %c0_84] : memref<1x1xf32, #tpu.memory_space<vmem>>, vector<1x1xf32>
    %133 = vector.extract %132[0, 0] : f32 from vector<1x1xf32>
    %c0_85 = arith.constant 0 : index
    %c0_86 = arith.constant 0 : index
    %c0_87 = arith.constant 0 : index
    %134 = vector.load %arg4[%c0_85, %c0_86, %c0_87] : memref<3x2x1xf32, #tpu.memory_space<vmem>>, vector<3x2x1xf32>
    %cst_88 = arith.constant 0.000000e+00 : f32
    %135 = vector.broadcast %cst_88 : f32 to vector<2x8xf32>
    %cst_89 = arith.constant 0.000000e+00 : f32
    %136 = vector.broadcast %cst_89 : f32 to vector<2x1xf32>
    %137 = vector.extract_strided_slice %129 {offsets = [0, 0, 0], sizes = [1, 2, 1], strides = [1, 1, 1]} : vector<3x2x1xf32> to vector<1x2x1xf32>
    %138 = vector.shape_cast %137 : vector<1x2x1xf32> to vector<2x1xf32>
    %139 = vector.extract_strided_slice %134 {offsets = [0, 0, 0], sizes = [1, 2, 1], strides = [1, 1, 1]} : vector<3x2x1xf32> to vector<1x2x1xf32>
    %140 = vector.shape_cast %139 : vector<1x2x1xf32> to vector<2x1xf32>
    %141 = arith.mulf %138, %140 : vector<2x1xf32>
    %142 = arith.addf %136, %141 : vector<2x1xf32>
    %143 = vector.extract_strided_slice %70 {offsets = [0, 0, 0], sizes = [1, 2, 8], strides = [1, 1, 1]} : vector<3x2x8xf32> to vector<1x2x8xf32>
    %144 = vector.shape_cast %143 : vector<1x2x8xf32> to vector<2x8xf32>
    %145 = vector.extract_strided_slice %89 {offsets = [1, 0, 0], sizes = [1, 2, 8], strides = [1, 1, 1]} : vector<3x2x8xf32> to vector<1x2x8xf32>
    %146 = vector.shape_cast %145 : vector<1x2x8xf32> to vector<2x8xf32>
    %147 = vector.extract_strided_slice %88 {offsets = [1, 0, 0], sizes = [1, 2, 8], strides = [1, 1, 1]} : vector<3x2x8xf32> to vector<1x2x8xf32>
    %148 = vector.shape_cast %147 : vector<1x2x8xf32> to vector<2x8xf32>
    %cst_90 = arith.constant dense<0xFF800000> : vector<2xf32>
    %149 = vector.multi_reduction <maximumf>, %135, %cst_90 [1] : vector<2x8xf32> to vector<2xf32>
    %150 = vector.shape_cast %149 : vector<2xf32> to vector<2x1xf32>
    %151 = vector.broadcast %150 : vector<2x1xf32> to vector<2x8xf32>
    %152 = arith.subf %135, %151 : vector<2x8xf32>
    %153 = math.exp %152 : vector<2x8xf32>
    %cst_91 = arith.constant dense<0.000000e+00> : vector<2xf32>
    %154 = vector.multi_reduction <add>, %153, %cst_91 [1] : vector<2x8xf32> to vector<2xf32>
    %155 = vector.shape_cast %154 : vector<2xf32> to vector<2x1xf32>
    %156 = math.log %155 : vector<2x1xf32>
    %157 = vector.broadcast %156 : vector<2x1xf32> to vector<2x8xf32>
    %158 = arith.subf %152, %157 : vector<2x8xf32>
    %159 = arith.subf %148, %158 : vector<2x8xf32>
    %160 = arith.mulf %146, %159 : vector<2x8xf32>
    %cst_92 = arith.constant dense<0.000000e+00> : vector<2xf32>
    %161 = vector.multi_reduction <add>, %160, %cst_92 [1] : vector<2x8xf32> to vector<2xf32>
    %162 = vector.shape_cast %161 : vector<2xf32> to vector<2x1xf32>
    %cst_93 = arith.constant 1.000000e-01 : f32
    %163 = vector.broadcast %cst_93 : f32 to vector<2x1xf32>
    %164 = arith.mulf %163, %162 : vector<2x1xf32>
    %165 = vector.extract_strided_slice %129 {offsets = [1, 0, 0], sizes = [1, 2, 1], strides = [1, 1, 1]} : vector<3x2x1xf32> to vector<1x2x1xf32>
    %166 = vector.shape_cast %165 : vector<1x2x1xf32> to vector<2x1xf32>
    %167 = arith.addf %166, %164 : vector<2x1xf32>
    %168 = vector.extract_strided_slice %134 {offsets = [1, 0, 0], sizes = [1, 2, 1], strides = [1, 1, 1]} : vector<3x2x1xf32> to vector<1x2x1xf32>
    %169 = vector.shape_cast %168 : vector<1x2x1xf32> to vector<2x1xf32>
    %170 = arith.mulf %167, %169 : vector<2x1xf32>
    %171 = arith.addf %142, %170 : vector<2x1xf32>
    %172 = vector.extract_strided_slice %59 {offsets = [1, 0, 0], sizes = [1, 2, 8], strides = [1, 1, 1]} : vector<3x2x8xf32> to vector<1x2x8xf32>
    %173 = vector.shape_cast %172 : vector<1x2x8xf32> to vector<2x8xf32>
    %174 = vector.shape_cast %173 : vector<2x8xf32> to vector<2x1x1x8xf32>
    %175 = vector.broadcast %174 : vector<2x1x1x8xf32> to vector<2x8x8x8xf32>
    %176 = arith.mulf %130, %175 : vector<2x8x8x8xf32>
    %cst_94 = arith.constant dense<0.000000e+00> : vector<2x8x8xf32>
    %177 = vector.multi_reduction <add>, %176, %cst_94 [3] : vector<2x8x8x8xf32> to vector<2x8x8xf32>
    %178 = vector.broadcast %133 : f32 to vector<2x8x8xf32>
    %179 = arith.addf %177, %178 : vector<2x8x8xf32>
    %cst_95 = arith.constant 0.000000e+00 : f32
    %180 = vector.broadcast %cst_95 : f32 to vector<2x8x8xf32>
    %181 = arith.cmpf oeq, %131, %180 : vector<2x8x8xf32>
    %cst_96 = arith.constant -9.99999995E+11 : f32
    %182 = vector.broadcast %cst_96 : f32 to vector<2x8x8xf32>
    %183 = arith.select %181, %182, %179 : vector<2x8x8xi1>, vector<2x8x8xf32>
    %cst_97 = arith.constant dense<0xFF800000> : vector<2x8xf32>
    %184 = vector.multi_reduction <maximumf>, %183, %cst_97 [1] : vector<2x8x8xf32> to vector<2x8xf32>
    %185 = vector.shape_cast %184 : vector<2x8xf32> to vector<2x1x8xf32>
    %186 = vector.broadcast %185 : vector<2x1x8xf32> to vector<2x8x8xf32>
    %187 = arith.subf %183, %186 : vector<2x8x8xf32>
    %188 = math.exp %187 : vector<2x8x8xf32>
    %cst_98 = arith.constant dense<0.000000e+00> : vector<2x8xf32>
    %189 = vector.multi_reduction <add>, %188, %cst_98 [1] : vector<2x8x8xf32> to vector<2x8xf32>
    %190 = vector.shape_cast %189 : vector<2x8xf32> to vector<2x1x8xf32>
    %191 = vector.broadcast %190 : vector<2x1x8xf32> to vector<2x8x8xf32>
    %192 = arith.divf %188, %191 : vector<2x8x8xf32>
    %193 = vector.shape_cast %144 : vector<2x8xf32> to vector<2x1x8xf32>
    %194 = vector.broadcast %193 : vector<2x1x8xf32> to vector<2x8x8xf32>
    %195 = arith.mulf %192, %194 : vector<2x8x8xf32>
    %cst_99 = arith.constant dense<0.000000e+00> : vector<2x8xf32>
    %196 = vector.multi_reduction <add>, %195, %cst_99 [2] : vector<2x8x8xf32> to vector<2x8xf32>
    %197 = vector.extract_strided_slice %70 {offsets = [1, 0, 0], sizes = [1, 2, 8], strides = [1, 1, 1]} : vector<3x2x8xf32> to vector<1x2x8xf32>
    %198 = vector.shape_cast %197 : vector<1x2x8xf32> to vector<2x8xf32>
    %199 = vector.extract_strided_slice %89 {offsets = [2, 0, 0], sizes = [1, 2, 8], strides = [1, 1, 1]} : vector<3x2x8xf32> to vector<1x2x8xf32>
    %200 = vector.shape_cast %199 : vector<1x2x8xf32> to vector<2x8xf32>
    %201 = vector.extract_strided_slice %88 {offsets = [2, 0, 0], sizes = [1, 2, 8], strides = [1, 1, 1]} : vector<3x2x8xf32> to vector<1x2x8xf32>
    %202 = vector.shape_cast %201 : vector<1x2x8xf32> to vector<2x8xf32>
    %cst_100 = arith.constant dense<0xFF800000> : vector<2xf32>
    %203 = vector.multi_reduction <maximumf>, %196, %cst_100 [1] : vector<2x8xf32> to vector<2xf32>
    %204 = vector.shape_cast %203 : vector<2xf32> to vector<2x1xf32>
    %205 = vector.broadcast %204 : vector<2x1xf32> to vector<2x8xf32>
    %206 = arith.subf %196, %205 : vector<2x8xf32>
    %207 = math.exp %206 : vector<2x8xf32>
    %cst_101 = arith.constant dense<0.000000e+00> : vector<2xf32>
    %208 = vector.multi_reduction <add>, %207, %cst_101 [1] : vector<2x8xf32> to vector<2xf32>
    %209 = vector.shape_cast %208 : vector<2xf32> to vector<2x1xf32>
    %210 = math.log %209 : vector<2x1xf32>
    %211 = vector.broadcast %210 : vector<2x1xf32> to vector<2x8xf32>
    %212 = arith.subf %206, %211 : vector<2x8xf32>
    %213 = arith.subf %202, %212 : vector<2x8xf32>
    %214 = arith.mulf %200, %213 : vector<2x8xf32>
    %cst_102 = arith.constant dense<0.000000e+00> : vector<2xf32>
    %215 = vector.multi_reduction <add>, %214, %cst_102 [1] : vector<2x8xf32> to vector<2xf32>
    %216 = vector.shape_cast %215 : vector<2xf32> to vector<2x1xf32>
    %cst_103 = arith.constant 1.000000e-01 : f32
    %217 = vector.broadcast %cst_103 : f32 to vector<2x1xf32>
    %218 = arith.mulf %217, %216 : vector<2x1xf32>
    %219 = vector.extract_strided_slice %129 {offsets = [2, 0, 0], sizes = [1, 2, 1], strides = [1, 1, 1]} : vector<3x2x1xf32> to vector<1x2x1xf32>
    %220 = vector.shape_cast %219 : vector<1x2x1xf32> to vector<2x1xf32>
    %221 = arith.addf %220, %218 : vector<2x1xf32>
    %222 = vector.extract_strided_slice %134 {offsets = [2, 0, 0], sizes = [1, 2, 1], strides = [1, 1, 1]} : vector<3x2x1xf32> to vector<1x2x1xf32>
    %223 = vector.shape_cast %222 : vector<1x2x1xf32> to vector<2x1xf32>
    %224 = arith.mulf %221, %223 : vector<2x1xf32>
    %225 = arith.addf %171, %224 : vector<2x1xf32>
    %226 = vector.extract_strided_slice %59 {offsets = [2, 0, 0], sizes = [1, 2, 8], strides = [1, 1, 1]} : vector<3x2x8xf32> to vector<1x2x8xf32>
    %227 = vector.shape_cast %226 : vector<1x2x8xf32> to vector<2x8xf32>
    %228 = vector.shape_cast %227 : vector<2x8xf32> to vector<2x1x1x8xf32>
    %229 = vector.broadcast %228 : vector<2x1x1x8xf32> to vector<2x8x8x8xf32>
    %230 = arith.mulf %130, %229 : vector<2x8x8x8xf32>
    %cst_104 = arith.constant dense<0.000000e+00> : vector<2x8x8xf32>
    %231 = vector.multi_reduction <add>, %230, %cst_104 [3] : vector<2x8x8x8xf32> to vector<2x8x8xf32>
    %232 = vector.broadcast %133 : f32 to vector<2x8x8xf32>
    %233 = arith.addf %231, %232 : vector<2x8x8xf32>
    %cst_105 = arith.constant 0.000000e+00 : f32
    %234 = vector.broadcast %cst_105 : f32 to vector<2x8x8xf32>
    %235 = arith.cmpf oeq, %131, %234 : vector<2x8x8xf32>
    %cst_106 = arith.constant -9.99999995E+11 : f32
    %236 = vector.broadcast %cst_106 : f32 to vector<2x8x8xf32>
    %237 = arith.select %235, %236, %233 : vector<2x8x8xi1>, vector<2x8x8xf32>
    %cst_107 = arith.constant dense<0xFF800000> : vector<2x8xf32>
    %238 = vector.multi_reduction <maximumf>, %237, %cst_107 [1] : vector<2x8x8xf32> to vector<2x8xf32>
    %239 = vector.shape_cast %238 : vector<2x8xf32> to vector<2x1x8xf32>
    %240 = vector.broadcast %239 : vector<2x1x8xf32> to vector<2x8x8xf32>
    %241 = arith.subf %237, %240 : vector<2x8x8xf32>
    %242 = math.exp %241 : vector<2x8x8xf32>
    %cst_108 = arith.constant dense<0.000000e+00> : vector<2x8xf32>
    %243 = vector.multi_reduction <add>, %242, %cst_108 [1] : vector<2x8x8xf32> to vector<2x8xf32>
    %244 = vector.shape_cast %243 : vector<2x8xf32> to vector<2x1x8xf32>
    %245 = vector.broadcast %244 : vector<2x1x8xf32> to vector<2x8x8xf32>
    %246 = arith.divf %242, %245 : vector<2x8x8xf32>
    %247 = vector.shape_cast %198 : vector<2x8xf32> to vector<2x1x8xf32>
    %248 = vector.broadcast %247 : vector<2x1x8xf32> to vector<2x8x8xf32>
    %249 = arith.mulf %246, %248 : vector<2x8x8xf32>
    %cst_109 = arith.constant dense<0.000000e+00> : vector<2x8xf32>
    %250 = vector.multi_reduction <add>, %249, %cst_109 [2] : vector<2x8x8xf32> to vector<2x8xf32>
    %cst_110 = arith.constant dense<0xFF800000> : vector<2xf32>
    %251 = vector.multi_reduction <maximumf>, %250, %cst_110 [1] : vector<2x8xf32> to vector<2xf32>
    %252 = vector.shape_cast %251 : vector<2xf32> to vector<2x1xf32>
    %253 = vector.broadcast %252 : vector<2x1xf32> to vector<2x8xf32>
    %254 = arith.subf %250, %253 : vector<2x8xf32>
    %255 = math.exp %254 : vector<2x8xf32>
    %cst_111 = arith.constant dense<0.000000e+00> : vector<2xf32>
    %256 = vector.multi_reduction <add>, %255, %cst_111 [1] : vector<2x8xf32> to vector<2xf32>
    %257 = vector.shape_cast %256 : vector<2xf32> to vector<2x1xf32>
    %258 = math.log %257 : vector<2x1xf32>
    %259 = vector.broadcast %258 : vector<2x1xf32> to vector<2x8xf32>
    %260 = arith.subf %254, %259 : vector<2x8xf32>
    %261 = arith.subf %99, %260 : vector<2x8xf32>
    %262 = arith.mulf %100, %261 : vector<2x8xf32>
    %cst_112 = arith.constant dense<0.000000e+00> : vector<2xf32>
    %263 = vector.multi_reduction <add>, %262, %cst_112 [1] : vector<2x8xf32> to vector<2xf32>
    %264 = vector.shape_cast %263 : vector<2xf32> to vector<2x1xf32>
    %cst_113 = arith.constant 1.000000e-01 : f32
    %265 = vector.broadcast %cst_113 : f32 to vector<2x1xf32>
    %266 = arith.mulf %265, %264 : vector<2x1xf32>
    %267 = arith.addf %225, %266 : vector<2x1xf32>
    %cst_114 = arith.constant dense<0.000000e+00> : vector<1xf32>
    %268 = vector.multi_reduction <add>, %267, %cst_114 [0] : vector<2x1xf32> to vector<1xf32>
    %269 = vector.shape_cast %268 : vector<1xf32> to vector<1x1xf32>
    %cst_115 = arith.constant 5.000000e-01 : f32
    %270 = vector.broadcast %cst_115 : f32 to vector<1x1xf32>
    %271 = arith.mulf %269, %270 : vector<1x1xf32>
    %c0_116 = arith.constant 0 : index
    %c0_117 = arith.constant 0 : index
    %272 = vector.load %arg19[%c0_116, %c0_117] : memref<1x1xf32, #tpu.memory_space<vmem>>, vector<1x1xf32>
    tpu.vector_store %arg19[%c0_116, %c0_117], %271 {strides = array<i32>} : memref<1x1xf32, #tpu.memory_space<vmem>>, vector<1x1xf32>,
    %273 = vector.shape_cast %100 : vector<2x8xf32> to vector<2x8x1xf32>
    %274 = vector.broadcast %273 : vector<2x8x1xf32> to vector<2x8x32xf32>
    %275 = arith.mulf %0, %274 : vector<2x8x32xf32>
    %cst_118 = arith.constant dense<0.000000e+00> : vector<2x32xf32>
    %276 = vector.multi_reduction <add>, %275, %cst_118 [1] : vector<2x8x32xf32> to vector<2x32xf32>
    %c0_119 = arith.constant 0 : index
    %c0_120 = arith.constant 0 : index
    %277 = vector.load %arg20[%c0_119, %c0_120] : memref<2x32xf32, #tpu.memory_space<vmem>>, vector<2x32xf32>
    tpu.vector_store %arg20[%c0_119, %c0_120], %276 {strides = array<i32>} : memref<2x32xf32, #tpu.memory_space<vmem>>, vector<2x32xf32>,
    return
  }
}

</mosaic_0001>

<llo_original>
// kernel: time_reasoning_forward.1
$region0: #{time_reasoning_forward.1}
  #allocation0 [shape = 'u32[]', space=smem, size = 0x4, offset = 0x4, fixed_abs, tag = 'smem constant byte address 0x4 - core index']
  #allocation1 [shape = 'u32[144,128]{1,0:T(1,128)}', space=vmem, size = 0x12000, scoped, tag = 'internal scratch']
  #allocation2 [shape = 'f32[1,1]{1,0:T(1,128)S(1)}', space=vmem, size = 0x200, scoped, tag = 'scoped memory for time_reasoning_forward.1']
  %s0 = inlined_call_operand.vmem [shape: f32[3,2,16], index: 0, kind: input, shape index: {}]
  %s1 = inlined_call_operand.vmem [shape: f32[2,16], index: 1, kind: input, shape index: {}]
  %s2 = inlined_call_operand.vmem [shape: f32[3,2,16], index: 2, kind: input, shape index: {}]
  %s3 = inlined_call_operand.vmem [shape: f32[3,2,16], index: 3, kind: input, shape index: {}]
  %s4 = inlined_call_operand.vmem [shape: f32[3,2,1], index: 4, kind: input, shape index: {}]
  %s5 = inlined_call_operand.hbm [shape: f32[2,8,32], index: 5, kind: input, shape index: {}]
  %s6 = inlined_call_operand.hbm [shape: f32[2,8,8,8], index: 6, kind: input, shape index: {}]
  %s7 = inlined_call_operand.hbm [shape: f32[2,8,8], index: 7, kind: input, shape index: {}]
  %s8 = inlined_call_operand.vmem [shape: f32[2,32,16], index: 8, kind: input, shape index: {}]
  %s9 = inlined_call_operand.hbm [shape: f32[2,1,16], index: 9, kind: input, shape index: {}]
  %s10 = inlined_call_operand.hbm [shape: f32[2,16,16], index: 10, kind: input, shape index: {}]
  %s11 = inlined_call_operand.hbm [shape: f32[2,1,16], index: 11, kind: input, shape index: {}]
  %s12 = inlined_call_operand.hbm [shape: f32[2,1,16], index: 12, kind: input, shape index: {}]
  %s13 = inlined_call_operand.hbm [shape: f32[2,1,1], index: 13, kind: input, shape index: {}]
  %s14 = inlined_call_operand.vmem [shape: f32[16,8], index: 14, kind: input, shape index: {}]
  %s15 = inlined_call_operand.hbm [shape: f32[1,8], index: 15, kind: input, shape index: {}]
  %s16 = inlined_call_operand.<no memory space> [shape: f32[1,1], index: 16, kind: input, shape index: {}]
  %s17 = inlined_call_operand.vmem [shape: f32[32,16], index: 17, kind: input, shape index: {}]
  %s18 = inlined_call_operand.hbm [shape: f32[1,16], index: 18, kind: input, shape index: {}]
  %s19 = inlined_call_operand.hbm [shape: f32[1,1], index: 19, kind: output, shape index: {0}]
  %s20 = inlined_call_operand.hbm [shape: f32[2,32], index: 20, kind: output, shape index: {1}]
  %21 = xla_tuple %s19, %s20
  %s22 = sld [smem:[#allocation0]]
  $region134: #{time_reasoning_forward.1} parent=0
    _
  %s24 = ssub.s32 1, %s22
  %s25 = scalar_select 0, %s24, %s22
  %v26 = vstv %s16
  %27 = vst [vmem:[#allocation2] sm:$0x1] %v26
  $region1: #{time_reasoning_forward.1} parent=0
    #allocation3 [shape = 'u8[8192]{0}', space=vmem, size = 0x2000, scoped, tag = 'input window, operand 5, single buffered']
    #allocation4 [shape = 's32[1]{0}', space=sflag, size = 0x4, scoped, tag = 'scoped memory for time_reasoning_forward.1']
    #allocation5 [shape = 's32[1]{0}', space=sflag, size = 0x4, scoped, tag = 'scoped memory for time_reasoning_forward.1']
    #allocation6 [shape = 'u8[65536]{0}', space=vmem, size = 0x10000, scoped, tag = 'input window, operand 6, single buffered']
    #allocation7 [shape = 's32[1]{0}', space=sflag, size = 0x4, scoped, tag = 'scoped memory for time_reasoning_forward.1']
    #allocation8 [shape = 'u8[8192]{0}', space=vmem, size = 0x2000, scoped, tag = 'input window, operand 7, single buffered']
    #allocation9 [shape = 'u8[1024]{0}', space=vmem, size = 0x400, scoped, tag = 'input window, operand 9, single buffered']
    #allocation10 [shape = 's32[1]{0}', space=sflag, size = 0x4, scoped, tag = 'scoped memory for time_reasoning_forward.1']
    #allocation11 [shape = 'u8[16384]{0}', space=vmem, size = 0x4000, scoped, tag = 'input window, operand 10, single buffered']
    #allocation12 [shape = 'u8[1024]{0}', space=vmem, size = 0x400, scoped, tag = 'input window, operand 11, single buffered']
    #allocation13 [shape = 's32[1]{0}', space=sflag, size = 0x4, scoped, tag = 'scoped memory for time_reasoning_forward.1']
    #allocation14 [shape = 'u8[1024]{0}', space=vmem, size = 0x400, scoped, tag = 'input window, operand 12, single buffered']
    #allocation15 [shape = 'u8[1024]{0}', space=vmem, size = 0x400, scoped, tag = 'input window, operand 13, single buffered']
    #allocation16 [shape = 's32[1]{0}', space=sflag, size = 0x4, scoped, tag = 'scoped memory for time_reasoning_forward.1']
    #allocation17 [shape = 'u8[512]{0}', space=vmem, size = 0x400, scoped, tag = 'input window, operand 15, single buffered']
    #allocation18 [shape = 'u8[512]{0}', space=vmem, size = 0x400, scoped, tag = 'input window, operand 18, single buffered']
    #allocation19 [shape = 's32[1]{0}', space=sflag, size = 0x4, scoped, tag = 'scoped memory for time_reasoning_forward.1']
    #allocation20 [shape = 'u8[512]{0}', space=vmem, size = 0x400, scoped, tag = 'output window, operand 0, single buffered']
    #allocation21 [shape = 'u8[1024]{0}', space=vmem, size = 0x400, scoped, tag = 'output window, operand 1, single buffered']
    #allocation22 [shape = 's32[1]{0}', space=sflag, size = 0x4, scoped, tag = 'scoped memory for time_reasoning_forward.1']
    %28 = vsyncpa [#allocation4], 0
    %29 = vsyncpa [#allocation7], 0
    %30 = vsyncpa [#allocation10], 0
    %31 = vsyncpa [#allocation13], 0
    %32 = vsyncpa [#allocation16], 0
    %33 = vsyncpa [#allocation19], 0
    %34 = vsyncpa [#allocation5], 0
    %35 = vsyncpa [#allocation22], 0
    // Predicated region
    $region2: #{time_reasoning_forward.1} parent=1 // pred_check
      _
    $region3: #{time_reasoning_forward.1} parent=1 // pred_check_branch
      %37 = sbr.rel (0) target = $region5
    $region4: #{time_reasoning_forward.1} parent=1 // pred_region
      _
    $region5: #{time_reasoning_forward.1} parent=1 // pred_fallthru
      _
    // Predicated region
    $region6: #{time_reasoning_forward.1} parent=1 // pred_check
      _
    $region7: #{time_reasoning_forward.1} parent=1 // pred_check_branch
      %39 = sbr.rel (0) target = $region9
    $region8: #{time_reasoning_forward.1} parent=1 // pred_region
      _
    $region9: #{time_reasoning_forward.1} parent=1 // pred_fallthru
      _
    // Predicated region
    $region10: #{time_reasoning_forward.1} parent=1 // pred_check
      _
    $region11: #{time_reasoning_forward.1} parent=1 // pred_check_branch
      %41 = sbr.rel (0) target = $region13
    $region12: #{time_reasoning_forward.1} parent=1 // pred_region
      _
    $region13: #{time_reasoning_forward.1} parent=1 // pred_fallthru
      _
    // Predicated region
    $region14: #{time_reasoning_forward.1} parent=1 // pred_check
      _
    $region15: #{time_reasoning_forward.1} parent=1 // pred_check_branch
      %43 = sbr.rel (0) target = $region17
    $region16: #{time_reasoning_forward.1} parent=1 // pred_region
      _
    $region17: #{time_reasoning_forward.1} parent=1 // pred_fallthru
      _
    // Predicated region
    $region18: #{time_reasoning_forward.1} parent=1 // pred_check
      _
    $region19: #{time_reasoning_forward.1} parent=1 // pred_check_branch
      %45 = sbr.rel (0) target = $region21
    $region20: #{time_reasoning_forward.1} parent=1 // pred_region
      _
    $region21: #{time_reasoning_forward.1} parent=1 // pred_fallthru
      _
    // Predicated region
    $region22: #{time_reasoning_forward.1} parent=1 // pred_check
      _
    $region23: #{time_reasoning_forward.1} parent=1 // pred_check_branch
      %47 = sbr.rel (0) target = $region25
    $region24: #{time_reasoning_forward.1} parent=1 // pred_region
      %s49 = ssub.s32 256, 256
      %50 = vsyncadd [#allocation4], %s49
      %s51 = sshll.u32 [#allocation3], 4
      %s52 = int_to_ptr.vmem [resolvable:$true] %s51
      %57 = dma.hbm_to_vmem [thread:$0]  %s5, 256, %s52, [#allocation4], 128, 128, 8
    $region25: #{time_reasoning_forward.1} parent=1 // pred_fallthru
      _
    // Predicated region
    $region26: #{time_reasoning_forward.1} parent=1 // pred_check
      _
    $region27: #{time_reasoning_forward.1} parent=1 // pred_check_branch
      %59 = sbr.rel (0) target = $region29
    $region28: #{time_reasoning_forward.1} parent=1 // pred_region
      %s61 = ssub.s32 2048, 2048
      %62 = vsyncadd [#allocation7], %s61
      %s63 = sshll.u32 [#allocation6], 4
      %s64 = int_to_ptr.vmem [resolvable:$true] %s63
      %69 = dma.hbm_to_vmem [thread:$0]  %s6, 2048, %s64, [#allocation7], 128, 128, 8
    $region29: #{time_reasoning_forward.1} parent=1 // pred_fallthru
      _
    // Predicated region
    $region30: #{time_reasoning_forward.1} parent=1 // pred_check
      _
    $region31: #{time_reasoning_forward.1} parent=1 // pred_check_branch
      %71 = sbr.rel (0) target = $region33
    $region32: #{time_reasoning_forward.1} parent=1 // pred_region
      %s73 = ssub.s32 256, 256
      %74 = vsyncadd [#allocation7], %s73
      %s75 = sshll.u32 [#allocation8], 4
      %s76 = int_to_ptr.vmem [resolvable:$true] %s75
      %81 = dma.hbm_to_vmem [thread:$0]  %s7, 256, %s76, [#allocation7], 128, 128, 8
    $region33: #{time_reasoning_forward.1} parent=1 // pred_fallthru
      _
    // Predicated region
    $region34: #{time_reasoning_forward.1} parent=1 // pred_check
      _
    $region35: #{time_reasoning_forward.1} parent=1 // pred_check_branch
      %83 = sbr.rel (0) target = $region37
    $region36: #{time_reasoning_forward.1} parent=1 // pred_region
      _
    $region37: #{time_reasoning_forward.1} parent=1 // pred_fallthru
      _
    // Predicated region
    $region38: #{time_reasoning_forward.1} parent=1 // pred_check
      _
    $region39: #{time_reasoning_forward.1} parent=1 // pred_check_branch
      %85 = sbr.rel (0) target = $region41
    $region40: #{time_reasoning_forward.1} parent=1 // pred_region
      %s87 = ssub.s32 32, 32
      %88 = vsyncadd [#allocation10], %s87
      %s89 = sshll.u32 [#allocation9], 4
      %s90 = int_to_ptr.vmem [resolvable:$true] %s89
      %95 = dma.hbm_to_vmem [thread:$0]  %s9, 32, %s90, [#allocation10], 16, 16, 1
    $region41: #{time_reasoning_forward.1} parent=1 // pred_fallthru
      _
    // Predicated region
    $region42: #{time_reasoning_forward.1} parent=1 // pred_check
      _
    $region43: #{time_reasoning_forward.1} parent=1 // pred_check_branch
      %97 = sbr.rel (0) target = $region45
    $region44: #{time_reasoning_forward.1} parent=1 // pred_region
      %s99 = ssub.s32 512, 512
      %100 = vsyncadd [#allocation10], %s99
      %s101 = sshll.u32 [#allocation11], 4
      %s102 = int_to_ptr.vmem [resolvable:$true] %s101
      %107 = dma.hbm_to_vmem [thread:$0]  %s10, 512, %s102, [#allocation10], 128, 128, 8
    $region45: #{time_reasoning_forward.1} parent=1 // pred_fallthru
      _
    // Predicated region
    $region46: #{time_reasoning_forward.1} parent=1 // pred_check
      _
    $region47: #{time_reasoning_forward.1} parent=1 // pred_check_branch
      %109 = sbr.rel (0) target = $region49
    $region48: #{time_reasoning_forward.1} parent=1 // pred_region
      %s111 = ssub.s32 32, 32
      %112 = vsyncadd [#allocation13], %s111
      %s113 = sshll.u32 [#allocation12], 4
      %s114 = int_to_ptr.vmem [resolvable:$true] %s113
      %119 = dma.hbm_to_vmem [thread:$0]  %s11, 32, %s114, [#allocation13], 16, 16, 1
    $region49: #{time_reasoning_forward.1} parent=1 // pred_fallthru
      _
    // Predicated region
    $region50: #{time_reasoning_forward.1} parent=1 // pred_check
      _
    $region51: #{time_reasoning_forward.1} parent=1 // pred_check_branch
      %121 = sbr.rel (0) target = $region53
    $region52: #{time_reasoning_forward.1} parent=1 // pred_region
      %s123 = ssub.s32 32, 32
      %124 = vsyncadd [#allocation13], %s123
      %s125 = sshll.u32 [#allocation14], 4
      %s126 = int_to_ptr.vmem [resolvable:$true] %s125
      %131 = dma.hbm_to_vmem [thread:$0]  %s12, 32, %s126, [#allocation13], 16, 16, 1
    $region53: #{time_reasoning_forward.1} parent=1 // pred_fallthru
      _
    // Predicated region
    $region54: #{time_reasoning_forward.1} parent=1 // pred_check
      _
    $region55: #{time_reasoning_forward.1} parent=1 // pred_check_branch
      %133 = sbr.rel (0) target = $region57
    $region56: #{time_reasoning_forward.1} parent=1 // pred_region
      %s135 = ssub.s32 32, 32
      %136 = vsyncadd [#allocation16], %s135
      %s137 = sshll.u32 [#allocation15], 4
      %s138 = int_to_ptr.vmem [resolvable:$true] %s137
      %143 = dma.hbm_to_vmem [thread:$0]  %s13, 32, %s138, [#allocation16], 16, 16, 1
    $region57: #{time_reasoning_forward.1} parent=1 // pred_fallthru
      _
    // Predicated region
    $region58: #{time_reasoning_forward.1} parent=1 // pred_check
      _
    $region59: #{time_reasoning_forward.1} parent=1 // pred_check_branch
      %145 = sbr.rel (0) target = $region61
    $region60: #{time_reasoning_forward.1} parent=1 // pred_region
      _
    $region61: #{time_reasoning_forward.1} parent=1 // pred_fallthru
      _
    // Predicated region
    $region62: #{time_reasoning_forward.1} parent=1 // pred_check
      _
    $region63: #{time_reasoning_forward.1} parent=1 // pred_check_branch
      %147 = sbr.rel (0) target = $region65
    $region64: #{time_reasoning_forward.1} parent=1 // pred_region
      %s149 = ssub.s32 16, 16
      %150 = vsyncadd [#allocation16], %s149
      %s152 = sshll.u32 [#allocation17], 4
      %s153 = int_to_ptr.vmem [resolvable:$true] %s152
      %155 = dma.hbm_to_vmem [thread:$0]  %s15, 16, %s153, [#allocation16]
    $region65: #{time_reasoning_forward.1} parent=1 // pred_fallthru
      _
    // Predicated region
    $region66: #{time_reasoning_forward.1} parent=1 // pred_check
      _
    $region67: #{time_reasoning_forward.1} parent=1 // pred_check_branch
      %157 = sbr.rel (0) target = $region69
    $region68: #{time_reasoning_forward.1} parent=1 // pred_region
      _
    $region69: #{time_reasoning_forward.1} parent=1 // pred_fallthru
      _
    // Predicated region
    $region70: #{time_reasoning_forward.1} parent=1 // pred_check
      _
    $region71: #{time_reasoning_forward.1} parent=1 // pred_check_branch
      %159 = sbr.rel (0) target = $region73
    $region72: #{time_reasoning_forward.1} parent=1 // pred_region
      _
    $region73: #{time_reasoning_forward.1} parent=1 // pred_fallthru
      _
    // Predicated region
    $region74: #{time_reasoning_forward.1} parent=1 // pred_check
      _
    $region75: #{time_reasoning_forward.1} parent=1 // pred_check_branch
      %161 = sbr.rel (0) target = $region77
    $region76: #{time_reasoning_forward.1} parent=1 // pred_region
      %s163 = ssub.s32 16, 16
      %164 = vsyncadd [#allocation19], %s163
      %s166 = sshll.u32 [#allocation18], 4
      %s167 = int_to_ptr.vmem [resolvable:$true] %s166
      %169 = dma.hbm_to_vmem [thread:$0]  %s18, 16, %s167, [#allocation19]
    $region77: #{time_reasoning_forward.1} parent=1 // pred_fallthru
      _
    // Predicated region
    $region78: #{time_reasoning_forward.1} parent=1 // pred_check
      _
    $region79: #{time_reasoning_forward.1} parent=1 // pred_check_branch
      %171 = sbr.rel (0) target = $region81
    $region80: #{time_reasoning_forward.1} parent=1 // pred_region
      %172 = dma.done [#allocation4], 256
    $region81: #{time_reasoning_forward.1} parent=1 // pred_fallthru
      _
    // Predicated region
    $region82: #{time_reasoning_forward.1} parent=1 // pred_check
      _
    $region83: #{time_reasoning_forward.1} parent=1 // pred_check_branch
      %174 = sbr.rel (0) target = $region85
    $region84: #{time_reasoning_forward.1} parent=1 // pred_region
      %175 = dma.done [#allocation7], 2048
    $region85: #{time_reasoning_forward.1} parent=1 // pred_fallthru
      _
    // Predicated region
    $region86: #{time_reasoning_forward.1} parent=1 // pred_check
      _
    $region87: #{time_reasoning_forward.1} parent=1 // pred_check_branch
      %177 = sbr.rel (0) target = $region89
    $region88: #{time_reasoning_forward.1} parent=1 // pred_region
      %178 = dma.done [#allocation7], 256
    $region89: #{time_reasoning_forward.1} parent=1 // pred_fallthru
      _
    // Predicated region
    $region90: #{time_reasoning_forward.1} parent=1 // pred_check
      _
    $region91: #{time_reasoning_forward.1} parent=1 // pred_check_branch
      %180 = sbr.rel (0) target = $region93
    $region92: #{time_reasoning_forward.1} parent=1 // pred_region
      %181 = dma.done [#allocation10], 32
    $region93: #{time_reasoning_forward.1} parent=1 // pred_fallthru
      _
    // Predicated region
    $region94: #{time_reasoning_forward.1} parent=1 // pred_check
      _
    $region95: #{time_reasoning_forward.1} parent=1 // pred_check_branch
      %183 = sbr.rel (0) target = $region97
    $region96: #{time_reasoning_forward.1} parent=1 // pred_region
      %184 = dma.done [#allocation10], 512
    $region97: #{time_reasoning_forward.1} parent=1 // pred_fallthru
      _
    // Predicated region
    $region98: #{time_reasoning_forward.1} parent=1 // pred_check
      _
    $region99: #{time_reasoning_forward.1} parent=1 // pred_check_branch
      %186 = sbr.rel (0) target = $region101
    $region100: #{time_reasoning_forward.1} parent=1 // pred_region
      %187 = dma.done [#allocation13], 32
    $region101: #{time_reasoning_forward.1} parent=1 // pred_fallthru
      _
    // Predicated region
    $region102: #{time_reasoning_forward.1} parent=1 // pred_check
      _
    $region103: #{time_reasoning_forward.1} parent=1 // pred_check_branch
      %189 = sbr.rel (0) target = $region105
    $region104: #{time_reasoning_forward.1} parent=1 // pred_region
      %190 = dma.done [#allocation13], 32
    $region105: #{time_reasoning_forward.1} parent=1 // pred_fallthru
      _
    // Predicated region
    $region106: #{time_reasoning_forward.1} parent=1 // pred_check
      _
    $region107: #{time_reasoning_forward.1} parent=1 // pred_check_branch
      %192 = sbr.rel (0) target = $region109
    $region108: #{time_reasoning_forward.1} parent=1 // pred_region
      %193 = dma.done [#allocation16], 32
    $region109: #{time_reasoning_forward.1} parent=1 // pred_fallthru
      _
    // Predicated region
    $region110: #{time_reasoning_forward.1} parent=1 // pred_check
      _
    $region111: #{time_reasoning_forward.1} parent=1 // pred_check_branch
      %195 = sbr.rel (0) target = $region113
    $region112: #{time_reasoning_forward.1} parent=1 // pred_region
      %196 = dma.done [#allocation16], 16
    $region113: #{time_reasoning_forward.1} parent=1 // pred_fallthru
      _
    // Predicated region
    $region114: #{time_reasoning_forward.1} parent=1 // pred_check
      _
    $region115: #{time_reasoning_forward.1} parent=1 // pred_check_branch
      %198 = sbr.rel (0) target = $region117
    $region116: #{time_reasoning_forward.1} parent=1 // pred_region
      %199 = dma.done [#allocation19], 16
    $region117: #{time_reasoning_forward.1} parent=1 // pred_fallthru
      _
    %v200 = vld [vmem:[#allocation3] sm:$0xff]
    %v201 = vld [vmem:[#allocation3 + $0x8] sm:$0xff]
    %v202 = vld [vmem:[%s8] sm:$0xff]
    %v203 = vld [vmem:[%s8 + $0x8] sm:$0xff]
    %v204 = vld [vmem:[%s8 + $0x10] sm:$0xff]
    %v205 = vld [vmem:[%s8 + $0x18] sm:$0xff]
    %v206 = vld [vmem:[#allocation9] sm:$0x1]
    %v208 = vlaneseq
    %v209 = vshrl.u32 %v208, 7
    %v210 = vsub.s32 0, %v209
    %v211 = vrot.slane %v206, %v210
    %vm213 = vcmask 261120
    %v215 = vsel %vm213, %v200, 0
    %v218 = vsel %vm213, %v201, 0
    %220 = vmatprep.subr.mxu0 0.0
    %221 = vmatpush1.msra.mxu0 %v202
    %222 = vmatprep.subr.mxu0 0.0
    %223 = vmatpush1.msra.mxu0 %v203
    %224 = vmatprep.subr.mxu0 0.0
    %225 = vmatpush1.msra.mxu0 %v204
    %226 = vmatprep.subr.mxu0 0.0
    %227 = vmatpush1.msra.mxu0 %v205
    %228 = vmatprep.subr.mxu0 0.0
    %229 = vmatpush1.msra.mxu0 0.0
    %230 = vmatprep.subr.mxu0 0.0
    %231 = vmatpush1.msra.mxu0 0.0
    %232 = vmatprep.subr.mxu0 0.0
    %233 = vmatpush1.msra.mxu0 0.0
    %234 = vmatprep.subr.mxu0 0.0
    %235 = vmatpush1.msra.mxu0 0.0
    %236 = vmatprep.subr.mxu0 0.0
    %237 = vmatpush1.msra.mxu0 0.0
    %238 = vmatprep.subr.mxu0 0.0
    %239 = vmatpush1.msra.mxu0 0.0
    %240 = vmatprep.subr.mxu0 0.0
    %241 = vmatpush1.msra.mxu0 0.0
    %242 = vmatprep.subr.mxu0 0.0
    %243 = vmatpush1.msra.mxu0 0.0
    %244 = vmatprep.subr.mxu0 0.0
    %245 = vmatpush1.msra.mxu0 0.0
    %246 = vmatprep.subr.mxu0 0.0
    %247 = vmatpush1.msra.mxu0 0.0
    %248 = vmatprep.subr.mxu0 0.0
    %249 = vmatpush1.msra.mxu0 0.0
    %250 = vmatprep.subr.mxu0 0.0
    %251 = vmatpush1.msra.mxu0 0.0
    %252 = vmatprep.subr.mxu0 0.0
    %253 = vmatpush1.msra.mxu0 0.0
    %254 = vmatprep.subr.mxu0 0.0
    %255 = vmatpush1.msra.mxu0 0.0
    %256 = vmatprep.subr.mxu0 0.0
    %257 = vmatpush1.msra.mxu0 0.0
    %258 = vmatprep.subr.mxu0 0.0
    %259 = vmatpush1.msra.mxu0 0.0
    %260 = vmatprep.subr.mxu0 0.0
    %261 = vmatpush1.msra.mxu0 0.0
    %262 = vmatprep.subr.mxu0 0.0
    %263 = vmatpush1.msra.mxu0 0.0
    %264 = vmatprep.subr.mxu0 0.0
    %265 = vmatpush1.msra.mxu0 0.0
    %266 = vmatprep.subr.mxu0 0.0
    %267 = vmatpush1.msra.mxu0 0.0
    %268 = vmatprep.subr.mxu0 0.0
    %269 = vmatpush1.msra.mxu0 0.0
    %270 = vmatprep.subr.mxu0 0.0
    %271 = vmatpush1.msra.mxu0 0.0
    %272 = vmatprep.subr.mxu0 0.0
    %273 = vmatpush1.msra.mxu0 0.0
    %274 = vmatprep.subr.mxu0 0.0
    %275 = vmatpush1.msra.mxu0 0.0
    %276 = vmatprep.subr.mxu0 0.0
    %277 = vmatpush1.msra.mxu0 0.0
    %278 = vmatprep.subr.mxu0 0.0
    %279 = vmatpush1.msra.mxu0 0.0
    %280 = vmatprep.subr.mxu0 0.0
    %281 = vmatpush1.msra.mxu0 0.0
    %282 = vmatprep.subr.mxu0 0.0
    %283 = vmatpush1.msra.mxu0 0.0
    %284 = vmatprep.mubr.f32.mxu0 0.0
    %285 = vmatmul.mubr.f32.gmra.mrb[0].mxu0 %v215
    %v286 = vpop.f32.mrb[0].mxu0
    %v287 = vadd.f32 %v211, %v286
    %v288 = vpop.f32.mrb[0].mxu0
    %289 = vmatprep.mubr.f32.mxu0 0.0
    %290 = vmatmul.mubr.f32.gmra.mrb[0].mxu0 %v218
    %v291 = vpop.f32.mrb[0].mxu0
    %v292 = vadd.f32 %v211, %v291
    %v293 = vpop.f32.mrb[0].mxu0
    %294 = vdwg.mxu0
    %v295 = vmax.f32 %v287, 0.0
    %v296 = vmax.f32 %v292, 0.0
    %v297 = vld [vmem:[#allocation14] sm:$0x1]
    %v299 = vlaneseq
    %v300 = vshrl.u32 %v299, 7
    %v301 = vsub.s32 0, %v300
    %v302 = vrot.slane %v297, %v301
    %v304 = vmul.f32 %v295, %v302
    %v305 = vmul.f32 %v296, %v302
    %s306 = scalar_lea.vmem %s8, 32
    %v307 = vld [vmem:[%s306] sm:$0xff]
    %v308 = vld [vmem:[%s306 + $0x8] sm:$0xff]
    %v309 = vld [vmem:[%s306 + $0x10] sm:$0xff]
    %v310 = vld [vmem:[%s306 + $0x18] sm:$0xff]
    %s311 = scalar_lea.vmem [#allocation9], 1
    %v312 = vld [vmem:[%s311] sm:$0x1]
    %v314 = vlaneseq
    %v315 = vshrl.u32 %v314, 7
    %v316 = vsub.s32 0, %v315
    %v317 = vrot.slane %v312, %v316
    %319 = vmatprep.subr.mxu0 0.0
    %320 = vmatpush1.msra.mxu0 %v307
    %321 = vmatprep.subr.mxu0 0.0
    %322 = vmatpush1.msra.mxu0 %v308
    %323 = vmatprep.subr.mxu0 0.0
    %324 = vmatpush1.msra.mxu0 %v309
    %325 = vmatprep.subr.mxu0 0.0
    %326 = vmatpush1.msra.mxu0 %v310
    %327 = vmatprep.subr.mxu0 0.0
    %328 = vmatpush1.msra.mxu0 0.0
    %329 = vmatprep.subr.mxu0 0.0
    %330 = vmatpush1.msra.mxu0 0.0
    %331 = vmatprep.subr.mxu0 0.0
    %332 = vmatpush1.msra.mxu0 0.0
    %333 = vmatprep.subr.mxu0 0.0
    %334 = vmatpush1.msra.mxu0 0.0
    %335 = vmatprep.subr.mxu0 0.0
    %336 = vmatpush1.msra.mxu0 0.0
    %337 = vmatprep.subr.mxu0 0.0
    %338 = vmatpush1.msra.mxu0 0.0
    %339 = vmatprep.subr.mxu0 0.0
    %340 = vmatpush1.msra.mxu0 0.0
    %341 = vmatprep.subr.mxu0 0.0
    %342 = vmatpush1.msra.mxu0 0.0
    %343 = vmatprep.subr.mxu0 0.0
    %344 = vmatpush1.msra.mxu0 0.0
    %345 = vmatprep.subr.mxu0 0.0
    %346 = vmatpush1.msra.mxu0 0.0
    %347 = vmatprep.subr.mxu0 0.0
    %348 = vmatpush1.msra.mxu0 0.0
    %349 = vmatprep.subr.mxu0 0.0
    %350 = vmatpush1.msra.mxu0 0.0
    %351 = vmatprep.subr.mxu0 0.0
    %352 = vmatpush1.msra.mxu0 0.0
    %353 = vmatprep.subr.mxu0 0.0
    %354 = vmatpush1.msra.mxu0 0.0
    %355 = vmatprep.subr.mxu0 0.0
    %356 = vmatpush1.msra.mxu0 0.0
    %357 = vmatprep.subr.mxu0 0.0
    %358 = vmatpush1.msra.mxu0 0.0
    %359 = vmatprep.subr.mxu0 0.0
    %360 = vmatpush1.msra.mxu0 0.0
    %361 = vmatprep.subr.mxu0 0.0
    %362 = vmatpush1.msra.mxu0 0.0
    %363 = vmatprep.subr.mxu0 0.0
    %364 = vmatpush1.msra.mxu0 0.0
    %365 = vmatprep.subr.mxu0 0.0
    %366 = vmatpush1.msra.mxu0 0.0
    %367 = vmatprep.subr.mxu0 0.0
    %368 = vmatpush1.msra.mxu0 0.0
    %369 = vmatprep.subr.mxu0 0.0
    %370 = vmatpush1.msra.mxu0 0.0
    %371 = vmatprep.subr.mxu0 0.0
    %372 = vmatpush1.msra.mxu0 0.0
    %373 = vmatprep.subr.mxu0 0.0
    %374 = vmatpush1.msra.mxu0 0.0
    %375 = vmatprep.subr.mxu0 0.0
    %376 = vmatpush1.msra.mxu0 0.0
    %377 = vmatprep.subr.mxu0 0.0
    %378 = vmatpush1.msra.mxu0 0.0
    %379 = vmatprep.subr.mxu0 0.0
    %380 = vmatpush1.msra.mxu0 0.0
    %381 = vmatprep.subr.mxu0 0.0
    %382 = vmatpush1.msra.mxu0 0.0
    %383 = vmatprep.mubr.f32.mxu0 0.0
    %384 = vmatmul.mubr.f32.gmra.mrb[0].mxu0 %v215
    %v385 = vpop.f32.mrb[0].mxu0
    %v386 = vadd.f32 %v317, %v385
    %v387 = vpop.f32.mrb[0].mxu0
    %388 = vmatprep.mubr.f32.mxu0 0.0
    %389 = vmatmul.mubr.f32.gmra.mrb[0].mxu0 %v218
    %v390 = vpop.f32.mrb[0].mxu0
    %v391 = vadd.f32 %v317, %v390
    %v392 = vpop.f32.mrb[0].mxu0
    %393 = vdwg.mxu0
    %v394 = vmax.f32 %v386, 0.0
    %v395 = vmax.f32 %v391, 0.0
    %s396 = scalar_lea.vmem [#allocation14], 1
    %v397 = vld [vmem:[%s396] sm:$0x1]
    %v399 = vlaneseq
    %v400 = vshrl.u32 %v399, 7
    %v401 = vsub.s32 0, %v400
    %v402 = vrot.slane %v397, %v401
    %v404 = vmul.f32 %v394, %v402
    %v405 = vmul.f32 %v395, %v402
    %v406 = vld [vmem:[%s0] sm:$0x3]
    %v407 = vld [vmem:[%s0 + $0x2] sm:$0x3]
    %v408 = vld [vmem:[%s0 + $0x4] sm:$0x3]
    %v409 = vld [vmem:[#allocation11] sm:$0xff]
    %v410 = vld [vmem:[#allocation11 + $0x8] sm:$0xff]
    %v411 = vld [vmem:[#allocation12] sm:$0x1]
    %v413 = vlaneseq
    %v414 = vshrl.u32 %v413, 7
    %v415 = vsub.s32 0, %v414
    %v416 = vrot.slane %v411, %v415
    %v421 = vcombine.low %v406, %v407
    %v423 = vunpack.c.l.s4 1983009808
    %v424 = vunpack.c.0.s8 %v423
    %v425 = vlaneseq
    %v426 = vshrl.u32 %v425, 7
    %v427 = vsub.s32 %v424, %v426
    %v428 = vrot.slane %v421, %v427
    %v430 = vunpack.c.l.s4 1983009808
    %v431 = vunpack.c.0.s8 %v430
    %v432 = vlaneseq
    %v433 = vshrl.u32 %v432, 7
    %v434 = vsub.s32 %v431, %v433
    %v435 = vrot.slane %v408, %v434
    %v436 = vcombine.low %v428, %v435
    %vm437 = vcmask 130048
    %v438 = vsel %vm437, %v436, 0
    %440 = vmatprep.subr.mxu0 0.0
    %441 = vmatpush1.msra.mxu0 %v409
    %442 = vmatprep.subr.mxu0 0.0
    %443 = vmatpush1.msra.mxu0 %v410
    %444 = vmatprep.subr.mxu0 0.0
    %445 = vmatpush1.msra.mxu0 0.0
    %446 = vmatprep.subr.mxu0 0.0
    %447 = vmatpush1.msra.mxu0 0.0
    %448 = vmatprep.subr.mxu0 0.0
    %449 = vmatpush1.msra.mxu0 0.0
    %450 = vmatprep.subr.mxu0 0.0
    %451 = vmatpush1.msra.mxu0 0.0
    %452 = vmatprep.subr.mxu0 0.0
    %453 = vmatpush1.msra.mxu0 0.0
    %454 = vmatprep.subr.mxu0 0.0
    %455 = vmatpush1.msra.mxu0 0.0
    %456 = vmatprep.subr.mxu0 0.0
    %457 = vmatpush1.msra.mxu0 0.0
    %458 = vmatprep.subr.mxu0 0.0
    %459 = vmatpush1.msra.mxu0 0.0
    %460 = vmatprep.subr.mxu0 0.0
    %461 = vmatpush1.msra.mxu0 0.0
    %462 = vmatprep.subr.mxu0 0.0
    %463 = vmatpush1.msra.mxu0 0.0
    %464 = vmatprep.subr.mxu0 0.0
    %465 = vmatpush1.msra.mxu0 0.0
    %466 = vmatprep.subr.mxu0 0.0
    %467 = vmatpush1.msra.mxu0 0.0
    %468 = vmatprep.subr.mxu0 0.0
    %469 = vmatpush1.msra.mxu0 0.0
    %470 = vmatprep.subr.mxu0 0.0
    %471 = vmatpush1.msra.mxu0 0.0
    %472 = vmatprep.subr.mxu0 0.0
    %473 = vmatpush1.msra.mxu0 0.0
    %474 = vmatprep.subr.mxu0 0.0
    %475 = vmatpush1.msra.mxu0 0.0
    %476 = vmatprep.subr.mxu0 0.0
    %477 = vmatpush1.msra.mxu0 0.0
    %478 = vmatprep.subr.mxu0 0.0
    %479 = vmatpush1.msra.mxu0 0.0
    %480 = vmatprep.subr.mxu0 0.0
    %481 = vmatpush1.msra.mxu0 0.0
    %482 = vmatprep.subr.mxu0 0.0
    %483 = vmatpush1.msra.mxu0 0.0
    %484 = vmatprep.subr.mxu0 0.0
    %485 = vmatpush1.msra.mxu0 0.0
    %486 = vmatprep.subr.mxu0 0.0
    %487 = vmatpush1.msra.mxu0 0.0
    %488 = vmatprep.subr.mxu0 0.0
    %489 = vmatpush1.msra.mxu0 0.0
    %490 = vmatprep.subr.mxu0 0.0
    %491 = vmatpush1.msra.mxu0 0.0
    %492 = vmatprep.subr.mxu0 0.0
    %493 = vmatpush1.msra.mxu0 0.0
    %494 = vmatprep.subr.mxu0 0.0
    %495 = vmatpush1.msra.mxu0 0.0
    %496 = vmatprep.subr.mxu0 0.0
    %497 = vmatpush1.msra.mxu0 0.0
    %498 = vmatprep.subr.mxu0 0.0
    %499 = vmatpush1.msra.mxu0 0.0
    %500 = vmatprep.subr.mxu0 0.0
    %501 = vmatpush1.msra.mxu0 0.0
    %502 = vmatprep.subr.mxu0 0.0
    %503 = vmatpush1.msra.mxu0 0.0
    %504 = vmatprep.mubr.f32.mxu0 0.0
    %505 = vmatmul.mubr.f32.gmra.mrb[0].mxu0 %v438
    %v506 = vpop.f32.mrb[0].mxu0
    %v507 = vadd.f32 %v416, %v506
    %v508 = vpop.f32.mrb[0].mxu0
    %509 = vdwg.mxu0
    %v510 = vmax.f32 %v507, 0.0
    %v511 = vld [vmem:[%s1] sm:$0x3]
    %s512 = scalar_lea.vmem [#allocation11], 16
    %v513 = vld [vmem:[%s512] sm:$0xff]
    %v514 = vld [vmem:[%s512 + $0x8] sm:$0xff]
    %s515 = scalar_lea.vmem [#allocation12], 1
    %v516 = vld [vmem:[%s515] sm:$0x1]
    %v518 = vlaneseq
    %v519 = vshrl.u32 %v518, 7
    %v520 = vsub.s32 0, %v519
    %v521 = vrot.slane %v516, %v520
    %v524 = vsel %vm437, %v511, 0
    %526 = vmatprep.subr.mxu0 0.0
    %527 = vmatpush1.msra.mxu0 %v513
    %528 = vmatprep.subr.mxu0 0.0
    %529 = vmatpush1.msra.mxu0 %v514
    %530 = vmatprep.subr.mxu0 0.0
    %531 = vmatpush1.msra.mxu0 0.0
    %532 = vmatprep.subr.mxu0 0.0
    %533 = vmatpush1.msra.mxu0 0.0
    %534 = vmatprep.subr.mxu0 0.0
    %535 = vmatpush1.msra.mxu0 0.0
    %536 = vmatprep.subr.mxu0 0.0
    %537 = vmatpush1.msra.mxu0 0.0
    %538 = vmatprep.subr.mxu0 0.0
    %539 = vmatpush1.msra.mxu0 0.0
    %540 = vmatprep.subr.mxu0 0.0
    %541 = vmatpush1.msra.mxu0 0.0
    %542 = vmatprep.subr.mxu0 0.0
    %543 = vmatpush1.msra.mxu0 0.0
    %544 = vmatprep.subr.mxu0 0.0
    %545 = vmatpush1.msra.mxu0 0.0
    %546 = vmatprep.subr.mxu0 0.0
    %547 = vmatpush1.msra.mxu0 0.0
    %548 = vmatprep.subr.mxu0 0.0
    %549 = vmatpush1.msra.mxu0 0.0
    %550 = vmatprep.subr.mxu0 0.0
    %551 = vmatpush1.msra.mxu0 0.0
    %552 = vmatprep.subr.mxu0 0.0
    %553 = vmatpush1.msra.mxu0 0.0
    %554 = vmatprep.subr.mxu0 0.0
    %555 = vmatpush1.msra.mxu0 0.0
    %556 = vmatprep.subr.mxu0 0.0
    %557 = vmatpush1.msra.mxu0 0.0
    %558 = vmatprep.subr.mxu0 0.0
    %559 = vmatpush1.msra.mxu0 0.0
    %560 = vmatprep.subr.mxu0 0.0
    %561 = vmatpush1.msra.mxu0 0.0
    %562 = vmatprep.subr.mxu0 0.0
    %563 = vmatpush1.msra.mxu0 0.0
    %564 = vmatprep.subr.mxu0 0.0
    %565 = vmatpush1.msra.mxu0 0.0
    %566 = vmatprep.subr.mxu0 0.0
    %567 = vmatpush1.msra.mxu0 0.0
    %568 = vmatprep.subr.mxu0 0.0
    %569 = vmatpush1.msra.mxu0 0.0
    %570 = vmatprep.subr.mxu0 0.0
    %571 = vmatpush1.msra.mxu0 0.0
    %572 = vmatprep.subr.mxu0 0.0
    %573 = vmatpush1.msra.mxu0 0.0
    %574 = vmatprep.subr.mxu0 0.0
    %575 = vmatpush1.msra.mxu0 0.0
    %576 = vmatprep.subr.mxu0 0.0
    %577 = vmatpush1.msra.mxu0 0.0
    %578 = vmatprep.subr.mxu0 0.0
    %579 = vmatpush1.msra.mxu0 0.0
    %580 = vmatprep.subr.mxu0 0.0
    %581 = vmatpush1.msra.mxu0 0.0
    %582 = vmatprep.subr.mxu0 0.0
    %583 = vmatpush1.msra.mxu0 0.0
    %584 = vmatprep.subr.mxu0 0.0
    %585 = vmatpush1.msra.mxu0 0.0
    %586 = vmatprep.subr.mxu0 0.0
    %587 = vmatpush1.msra.mxu0 0.0
    %588 = vmatprep.subr.mxu0 0.0
    %589 = vmatpush1.msra.mxu0 0.0
    %590 = vmatprep.mubr.f32.mxu0 0.0
    %591 = vmatmul.mubr.f32.gmra.mrb[0].mxu0 %v524
    %v592 = vpop.f32.mrb[0].mxu0
    %v593 = vadd.f32 %v521, %v592
    %v594 = vpop.f32.mrb[0].mxu0
    %595 = vdwg.mxu0
    %v596 = vmax.f32 %v593, 0.0
    %v597 = vld [vmem:[%s2] sm:$0x3]
    %v598 = vld [vmem:[%s2 + $0x2] sm:$0x3]
    %v599 = vld [vmem:[%s2 + $0x4] sm:$0x3]
    %v600 = vld [vmem:[%s14] sm:$0xff]
    %v601 = vld [vmem:[%s14 + $0x8] sm:$0xff]
    %v602 = vld [vmem:[#allocation17] sm:$0x1]
    %v604 = vlaneseq
    %v605 = vshrl.u32 %v604, 7
    %v606 = vsub.s32 0, %v605
    %v607 = vrot.slane %v602, %v606
    %v612 = vcombine.low %v597, %v598
    %v614 = vunpack.c.l.s4 1983009808
    %v615 = vunpack.c.0.s8 %v614
    %v616 = vlaneseq
    %v617 = vshrl.u32 %v616, 7
    %v618 = vsub.s32 %v615, %v617
    %v619 = vrot.slane %v612, %v618
    %v621 = vunpack.c.l.s4 1983009808
    %v622 = vunpack.c.0.s8 %v621
    %v623 = vlaneseq
    %v624 = vshrl.u32 %v623, 7
    %v625 = vsub.s32 %v622, %v624
    %v626 = vrot.slane %v599, %v625
    %v627 = vcombine.low %v619, %v626
    %v628 = vsel %vm437, %v627, 0
    %630 = vmatprep.subr.mxu0 0.0
    %631 = vmatpush1.msra.mxu0 %v600
    %632 = vmatprep.subr.mxu0 0.0
    %633 = vmatpush1.msra.mxu0 %v601
    %634 = vmatprep.subr.mxu0 0.0
    %635 = vmatpush1.msra.mxu0 0.0
    %636 = vmatprep.subr.mxu0 0.0
    %637 = vmatpush1.msra.mxu0 0.0
    %638 = vmatprep.subr.mxu0 0.0
    %639 = vmatpush1.msra.mxu0 0.0
    %640 = vmatprep.subr.mxu0 0.0
    %641 = vmatpush1.msra.mxu0 0.0
    %642 = vmatprep.subr.mxu0 0.0
    %643 = vmatpush1.msra.mxu0 0.0
    %644 = vmatprep.subr.mxu0 0.0
    %645 = vmatpush1.msra.mxu0 0.0
    %646 = vmatprep.subr.mxu0 0.0
    %647 = vmatpush1.msra.mxu0 0.0
    %648 = vmatprep.subr.mxu0 0.0
    %649 = vmatpush1.msra.mxu0 0.0
    %650 = vmatprep.subr.mxu0 0.0
    %651 = vmatpush1.msra.mxu0 0.0
    %652 = vmatprep.subr.mxu0 0.0
    %653 = vmatpush1.msra.mxu0 0.0
    %654 = vmatprep.subr.mxu0 0.0
    %655 = vmatpush1.msra.mxu0 0.0
    %656 = vmatprep.subr.mxu0 0.0
    %657 = vmatpush1.msra.mxu0 0.0
    %658 = vmatprep.subr.mxu0 0.0
    %659 = vmatpush1.msra.mxu0 0.0
    %660 = vmatprep.subr.mxu0 0.0
    %661 = vmatpush1.msra.mxu0 0.0
    %662 = vmatprep.subr.mxu0 0.0
    %663 = vmatpush1.msra.mxu0 0.0
    %664 = vmatprep.subr.mxu0 0.0
    %665 = vmatpush1.msra.mxu0 0.0
    %666 = vmatprep.subr.mxu0 0.0
    %667 = vmatpush1.msra.mxu0 0.0
    %668 = vmatprep.subr.mxu0 0.0
    %669 = vmatpush1.msra.mxu0 0.0
    %670 = vmatprep.subr.mxu0 0.0
    %671 = vmatpush1.msra.mxu0 0.0
    %672 = vmatprep.subr.mxu0 0.0
    %673 = vmatpush1.msra.mxu0 0.0
    %674 = vmatprep.subr.mxu0 0.0
    %675 = vmatpush1.msra.mxu0 0.0
    %676 = vmatprep.subr.mxu0 0.0
    %677 = vmatpush1.msra.mxu0 0.0
    %678 = vmatprep.subr.mxu0 0.0
    %679 = vmatpush1.msra.mxu0 0.0
    %680 = vmatprep.subr.mxu0 0.0
    %681 = vmatpush1.msra.mxu0 0.0
    %682 = vmatprep.subr.mxu0 0.0
    %683 = vmatpush1.msra.mxu0 0.0
    %684 = vmatprep.subr.mxu0 0.0
    %685 = vmatpush1.msra.mxu0 0.0
    %686 = vmatprep.subr.mxu0 0.0
    %687 = vmatpush1.msra.mxu0 0.0
    %688 = vmatprep.subr.mxu0 0.0
    %689 = vmatpush1.msra.mxu0 0.0
    %690 = vmatprep.subr.mxu0 0.0
    %691 = vmatpush1.msra.mxu0 0.0
    %692 = vmatprep.subr.mxu0 0.0
    %693 = vmatpush1.msra.mxu0 0.0
    %694 = vmatprep.mubr.f32.mxu0 0.0
    %695 = vmatmul.mubr.f32.gmra.mrb[0].mxu0 %v628
    %v696 = vpop.f32.mrb[0].mxu0
    %v697 = vadd.f32 %v607, %v696
    %v698 = vpop.f32.mrb[0].mxu0
    %699 = vdwg.mxu0
    %v701 = vcombine.high %v697, %v697
    %v703 = vunpack.c.l.s4 1983009808
    %v704 = vunpack.c.0.s8 %v703
    %v705 = vlaneseq
    %v706 = vshrl.u32 %v705, 7
    %v707 = vsub.s32 %v704, %v706
    %v708 = vrot.slane %v697, %v707
    %v710 = vunpack.c.l.s4 1983009808
    %v711 = vunpack.c.0.s8 %v710
    %v712 = vlaneseq
    %v713 = vshrl.u32 %v712, 7
    %v714 = vsub.s32 %v711, %v713
    %v715 = vrot.slane %v701, %v714
    %v716 = vcombine.high %v708, %v708
    %v718 = vcombine.high %v510, %v510
    %v720 = vunpack.c.l.s4 1966171168
    %v721 = vunpack.c.0.s8 %v720
    %v722 = vlaneseq
    %v723 = vshrl.u32 %v722, 7
    %v724 = vsub.s32 %v721, %v723
    %v725 = vrot.slane %v510, %v724
    %v727 = vunpack.c.l.s4 1966171168
    %v728 = vunpack.c.0.s8 %v727
    %v729 = vlaneseq
    %v730 = vshrl.u32 %v729, 7
    %v731 = vsub.s32 %v728, %v730
    %v732 = vrot.slane %v718, %v731
    %v733 = vcombine.high %v725, %v725
    %v734 = vcombine.high %v732, %v732
    %v736 = vunpack.c.l.s4 1966171168
    %v737 = vunpack.c.0.s8 %v736
    %v738 = vlaneseq
    %v739 = vshrl.u32 %v738, 7
    %v740 = vsub.s32 %v737, %v739
    %v741 = vrot.slane %v725, %v740
    %v743 = vunpack.c.l.s4 1966171168
    %v744 = vunpack.c.0.s8 %v743
    %v745 = vlaneseq
    %v746 = vshrl.u32 %v745, 7
    %v747 = vsub.s32 %v744, %v746
    %v748 = vrot.slane %v732, %v747
    %v750 = vunpack.c.l.s4 1966171168
    %v751 = vunpack.c.0.s8 %v750
    %v752 = vlaneseq
    %v753 = vshrl.u32 %v752, 7
    %v754 = vsub.s32 %v751, %v753
    %v755 = vrot.slane %v733, %v754
    %v757 = vunpack.c.l.s4 1966171168
    %v758 = vunpack.c.0.s8 %v757
    %v759 = vlaneseq
    %v760 = vshrl.u32 %v759, 7
    %v761 = vsub.s32 %v758, %v760
    %v762 = vrot.slane %v734, %v761
    %v763 = vcombine.high %v741, %v741
    %v764 = vcombine.high %v755, %v755
    %v765 = vlaneseq
    %v766 = vshrl.u32 %v765, 7
    %v767 = vsub.s32 0, %v766
    %v768 = vrot.slane %v741, %v767
    %v769 = vlaneseq
    %v770 = vshrl.u32 %v769, 7
    %v771 = vsub.s32 0, %v770
    %v772 = vrot.slane %v755, %v771
    %v773 = vlaneseq
    %v774 = vshrl.u32 %v773, 7
    %v775 = vsub.s32 0, %v774
    %v776 = vrot.slane %v763, %v775
    %v777 = vlaneseq
    %v778 = vshrl.u32 %v777, 7
    %v779 = vsub.s32 0, %v778
    %v780 = vrot.slane %v764, %v779
    %v781 = vlaneseq
    %v782 = vshrl.u32 %v781, 7
    %v783 = vsub.s32 0, %v782
    %v784 = vrot.slane %v748, %v783
    %v785 = vlaneseq
    %v786 = vshrl.u32 %v785, 7
    %v787 = vsub.s32 0, %v786
    %v788 = vrot.slane %v762, %v787
    %v795 = vmul.f32 %v304, %v768
    %v796 = vmul.f32 %v305, %v772
    %v797 = vmul.f32 %v304, %v776
    %v798 = vmul.f32 %v305, %v780
    %v799 = vmul.f32 %v304, %v784
    %v800 = vmul.f32 %v305, %v788
    %v801 = vsel %vm437, %v795, 0.0
    %802 = vadd.xlane.f32.xlu0 %v801
    %v803 = vpop.xlane.xlu0 %802
    %v804 = vsel %vm437, %v796, 0.0
    %805 = vadd.xlane.f32.xlu0 %v804
    %v806 = vpop.xlane.xlu0 %805
    %v807 = vsel %vm437, %v797, 0.0
    %808 = vadd.xlane.f32.xlu0 %v807
    %v809 = vpop.xlane.xlu0 %808
    %v810 = vsel %vm437, %v798, 0.0
    %811 = vadd.xlane.f32.xlu0 %v810
    %v812 = vpop.xlane.xlu0 %811
    %v813 = vsel %vm437, %v799, 0.0
    %814 = vadd.xlane.f32.xlu0 %v813
    %v815 = vpop.xlane.xlu0 %814
    %v816 = vsel %vm437, %v800, 0.0
    %817 = vadd.xlane.f32.xlu0 %v816
    %v818 = vpop.xlane.xlu0 %817
    %v819 = vld [vmem:[#allocation15] sm:$0x1]
    %v821 = vlaneseq
    %v822 = vshrl.u32 %v821, 7
    %v823 = vsub.s32 0, %v822
    %v824 = vrot.slane %v819, %v823
    %825 = vset.pattern.permute.xlu0 0
    %826 = vperm.xlu0 %825, %v824
    %v827 = vpop.permute.xlu0 %826
    %v829 = vadd.f32 %v803, %v827
    %v830 = vadd.f32 %v806, %v827
    %v831 = vadd.f32 %v809, %v827
    %v832 = vadd.f32 %v812, %v827
    %v833 = vadd.f32 %v815, %v827
    %v834 = vadd.f32 %v818, %v827
    %v837 = vunpack.c.l.s4 1966171168
    %v838 = vunpack.c.0.s8 %v837
    %v839 = vlaneseq
    %v840 = vshrl.u32 %v839, 7
    %v841 = vsub.s32 %v838, %v840
    %v842 = vrot.slane %v596, %v841
    %v843 = vcombine.high %v842, %v842
    %v845 = vunpack.c.l.s4 1966171168
    %v846 = vunpack.c.0.s8 %v845
    %v847 = vlaneseq
    %v848 = vshrl.u32 %v847, 7
    %v849 = vsub.s32 %v846, %v848
    %v850 = vrot.slane %v842, %v849
    %v852 = vunpack.c.l.s4 1966171168
    %v853 = vunpack.c.0.s8 %v852
    %v854 = vlaneseq
    %v855 = vshrl.u32 %v854, 7
    %v856 = vsub.s32 %v853, %v855
    %v857 = vrot.slane %v843, %v856
    %v858 = vlaneseq
    %v859 = vshrl.u32 %v858, 7
    %v860 = vsub.s32 0, %v859
    %v861 = vrot.slane %v850, %v860
    %v862 = vlaneseq
    %v863 = vshrl.u32 %v862, 7
    %v864 = vsub.s32 0, %v863
    %v865 = vrot.slane %v857, %v864
    %v868 = vmul.f32 %v404, %v861
    %v869 = vmul.f32 %v405, %v865
    %v870 = vsel %vm437, %v868, 0.0
    %871 = vadd.xlane.f32.xlu0 %v870
    %v872 = vpop.xlane.xlu0 %871
    %v873 = vsel %vm437, %v869, 0.0
    %874 = vadd.xlane.f32.xlu0 %v873
    %v875 = vpop.xlane.xlu0 %874
    %s876 = scalar_lea.vmem [#allocation15], 1
    %v877 = vld [vmem:[%s876] sm:$0x1]
    %v879 = vlaneseq
    %v880 = vshrl.u32 %v879, 7
    %v881 = vsub.s32 0, %v880
    %v882 = vrot.slane %v877, %v881
    %883 = vset.pattern.permute.xlu0 0
    %884 = vperm.xlu0 %883, %v882
    %v885 = vpop.permute.xlu0 %884
    %v887 = vadd.f32 %v872, %v885
    %v888 = vadd.f32 %v875, %v885
    %v895 = vlaneseq
    %v896 = vand.u32 %v895, 127
    %v897 = vlaneseq
    %v898 = vshrl.u32 %v897, 7
    %v899 = vsub.s32 %v896, %v898
    %v900 = vrot.slane %v829, %v899
    %v901 = vlaneseq
    %v902 = vshrl.u32 %v901, 7
    %v903 = vsub.s32 %v896, %v902
    %v904 = vrot.slane %v830, %v903
    %v905 = vlaneseq
    %v906 = vshrl.u32 %v905, 7
    %v907 = vsub.s32 %v896, %v906
    %v908 = vrot.slane %v831, %v907
    %v909 = vlaneseq
    %v910 = vshrl.u32 %v909, 7
    %v911 = vsub.s32 %v896, %v910
    %v912 = vrot.slane %v832, %v911
    %v913 = vlaneseq
    %v914 = vshrl.u32 %v913, 7
    %v915 = vsub.s32 %v896, %v914
    %v916 = vrot.slane %v833, %v915
    %v917 = vlaneseq
    %v918 = vshrl.u32 %v917, 7
    %v919 = vsub.s32 %v896, %v918
    %v920 = vrot.slane %v834, %v919
    %vm921 = vcmask 1041409
    %v922 = vsel %vm921, %v904, %v900
    %v923 = vsel %vm921, %v912, %v908
    %v924 = vsel %vm921, %v920, %v916
    %vm928 = vcmask 58368
    %v929 = vsel %vm928, %v922, -inf
    %930 = vmax.xlane.f32.xlu0 %v929
    %v931 = vpop.xlane.xlu0 %930
    %v932 = vsel %vm928, %v923, -inf
    %933 = vmax.xlane.f32.xlu0 %v932
    %v934 = vpop.xlane.xlu0 %933
    %v935 = vsel %vm928, %v924, -inf
    %936 = vmax.xlane.f32.xlu0 %v935
    %v937 = vpop.xlane.xlu0 %936
    %v941 = vlaneseq
    %v942 = vshrl.u32 %v941, 7
    %v943 = vsub.s32 0, %v942
    %v944 = vrot.slane %v931, %v943
    %v945 = vlaneseq
    %v946 = vshrl.u32 %v945, 7
    %v947 = vsub.s32 1, %v946
    %v948 = vrot.slane %v931, %v947
    %v949 = vlaneseq
    %v950 = vshrl.u32 %v949, 7
    %v951 = vsub.s32 0, %v950
    %v952 = vrot.slane %v934, %v951
    %v953 = vlaneseq
    %v954 = vshrl.u32 %v953, 7
    %v955 = vsub.s32 1, %v954
    %v956 = vrot.slane %v934, %v955
    %v957 = vlaneseq
    %v958 = vshrl.u32 %v957, 7
    %v959 = vsub.s32 0, %v958
    %v960 = vrot.slane %v937, %v959
    %v961 = vlaneseq
    %v962 = vshrl.u32 %v961, 7
    %v963 = vsub.s32 1, %v962
    %v964 = vrot.slane %v937, %v963
    %v971 = vsub.f32 %v829, %v944
    %v972 = vsub.f32 %v830, %v948
    %v973 = vsub.f32 %v831, %v952
    %v974 = vsub.f32 %v832, %v956
    %v975 = vsub.f32 %v833, %v960
    %v976 = vsub.f32 %v834, %v964
    %v977 = vmul.f32 %v971, 1.442695
    %v978 = vpow.pop %v977
    %v979 = vmul.f32 %v972, 1.442695
    %v980 = vpow.pop %v979
    %v981 = vmul.f32 %v973, 1.442695
    %v982 = vpow.pop %v981
    %v983 = vmul.f32 %v974, 1.442695
    %v984 = vpow.pop %v983
    %v985 = vmul.f32 %v975, 1.442695
    %v986 = vpow.pop %v985
    %v987 = vmul.f32 %v976, 1.442695
    %v988 = vpow.pop %v987
    %995 = vset.pattern.permute.xlu0 0
    %996 = vperm.xlu0 %995, %v978
    %v997 = vpop.permute.xlu0 %996
    %998 = vset.pattern.permute.xlu0 0
    %999 = vperm.xlu0 %998, %v980
    %v1000 = vpop.permute.xlu0 %999
    %1001 = vset.pattern.permute.xlu0 0
    %1002 = vperm.xlu0 %1001, %v982
    %v1003 = vpop.permute.xlu0 %1002
    %1004 = vset.pattern.permute.xlu0 0
    %1005 = vperm.xlu0 %1004, %v984
    %v1006 = vpop.permute.xlu0 %1005
    %1007 = vset.pattern.permute.xlu0 0
    %1008 = vperm.xlu0 %1007, %v986
    %v1009 = vpop.permute.xlu0 %1008
    %1010 = vset.pattern.permute.xlu0 0
    %1011 = vperm.xlu0 %1010, %v988
    %v1012 = vpop.permute.xlu0 %1011
    %v1013 = vlaneseq
    %v1014 = vshrl.u32 %v1013, 7
    %v1015 = vsub.s32 %v896, %v1014
    %v1016 = vrot.slane %v997, %v1015
    %v1017 = vlaneseq
    %v1018 = vshrl.u32 %v1017, 7
    %v1019 = vsub.s32 %v896, %v1018
    %v1020 = vrot.slane %v1000, %v1019
    %v1021 = vlaneseq
    %v1022 = vshrl.u32 %v1021, 7
    %v1023 = vsub.s32 %v896, %v1022
    %v1024 = vrot.slane %v1003, %v1023
    %v1025 = vlaneseq
    %v1026 = vshrl.u32 %v1025, 7
    %v1027 = vsub.s32 %v896, %v1026
    %v1028 = vrot.slane %v1006, %v1027
    %v1029 = vlaneseq
    %v1030 = vshrl.u32 %v1029, 7
    %v1031 = vsub.s32 %v896, %v1030
    %v1032 = vrot.slane %v1009, %v1031
    %v1033 = vlaneseq
    %v1034 = vshrl.u32 %v1033, 7
    %v1035 = vsub.s32 %v896, %v1034
    %v1036 = vrot.slane %v1012, %v1035
    %v1037 = vsel %vm921, %v1020, %v1016
    %v1038 = vsel %vm921, %v1028, %v1024
    %v1039 = vsel %vm921, %v1036, %v1032
    %v1043 = vsel %vm928, %v1037, 0.0
    %1044 = vadd.xlane.f32.xlu0 %v1043
    %v1045 = vpop.xlane.xlu0 %1044
    %v1046 = vsel %vm928, %v1038, 0.0
    %1047 = vadd.xlane.f32.xlu0 %v1046
    %v1048 = vpop.xlane.xlu0 %1047
    %v1049 = vsel %vm928, %v1039, 0.0
    %1050 = vadd.xlane.f32.xlu0 %v1049
    %v1051 = vpop.xlane.xlu0 %1050
    %v1052 = vlog2.pop %v1045
    %v1053 = vmul.f32 %v1052, 0.6931472
    %v1054 = vlog2.pop %v1048
    %v1055 = vmul.f32 %v1054, 0.6931472
    %v1056 = vlog2.pop %v1051
    %v1057 = vmul.f32 %v1056, 0.6931472
    %v1061 = vlaneseq
    %v1062 = vshrl.u32 %v1061, 7
    %v1063 = vsub.s32 0, %v1062
    %v1064 = vrot.slane %v1053, %v1063
    %v1065 = vlaneseq
    %v1066 = vshrl.u32 %v1065, 7
    %v1067 = vsub.s32 1, %v1066
    %v1068 = vrot.slane %v1053, %v1067
    %v1069 = vlaneseq
    %v1070 = vshrl.u32 %v1069, 7
    %v1071 = vsub.s32 0, %v1070
    %v1072 = vrot.slane %v1055, %v1071
    %v1073 = vlaneseq
    %v1074 = vshrl.u32 %v1073, 7
    %v1075 = vsub.s32 1, %v1074
    %v1076 = vrot.slane %v1055, %v1075
    %v1077 = vlaneseq
    %v1078 = vshrl.u32 %v1077, 7
    %v1079 = vsub.s32 0, %v1078
    %v1080 = vrot.slane %v1057, %v1079
    %v1081 = vlaneseq
    %v1082 = vshrl.u32 %v1081, 7
    %v1083 = vsub.s32 1, %v1082
    %v1084 = vrot.slane %v1057, %v1083
    %v1091 = vsub.f32 %v971, %v1064
    %v1092 = vsub.f32 %v972, %v1068
    %v1093 = vsub.f32 %v973, %v1072
    %v1094 = vsub.f32 %v974, %v1076
    %v1095 = vsub.f32 %v975, %v1080
    %v1096 = vsub.f32 %v976, %v1084
    %v1097 = vmul.f32 %v1091, 1.442695
    %v1098 = vpow.pop %v1097
    %v1099 = vmul.f32 %v1092, 1.442695
    %v1100 = vpow.pop %v1099
    %v1101 = vmul.f32 %v1093, 1.442695
    %v1102 = vpow.pop %v1101
    %v1103 = vmul.f32 %v1094, 1.442695
    %v1104 = vpow.pop %v1103
    %v1105 = vmul.f32 %v1095, 1.442695
    %v1106 = vpow.pop %v1105
    %v1107 = vmul.f32 %v1096, 1.442695
    %v1108 = vpow.pop %v1107
    %v1111 = vlaneseq
    %v1112 = vshrl.u32 %v1111, 7
    %v1113 = vsub.s32 %v896, %v1112
    %v1114 = vrot.slane %v887, %v1113
    %v1115 = vlaneseq
    %v1116 = vshrl.u32 %v1115, 7
    %v1117 = vsub.s32 %v896, %v1116
    %v1118 = vrot.slane %v888, %v1117
    %v1119 = vsel %vm921, %v1118, %v1114
    %v1121 = vsel %vm928, %v1119, -inf
    %1122 = vmax.xlane.f32.xlu0 %v1121
    %v1123 = vpop.xlane.xlu0 %1122
    %v1125 = vlaneseq
    %v1126 = vshrl.u32 %v1125, 7
    %v1127 = vsub.s32 0, %v1126
    %v1128 = vrot.slane %v1123, %v1127
    %v1129 = vlaneseq
    %v1130 = vshrl.u32 %v1129, 7
    %v1131 = vsub.s32 1, %v1130
    %v1132 = vrot.slane %v1123, %v1131
    %v1135 = vsub.f32 %v887, %v1128
    %v1136 = vsub.f32 %v888, %v1132
    %v1137 = vmul.f32 %v1135, 1.442695
    %v1138 = vpow.pop %v1137
    %v1139 = vmul.f32 %v1136, 1.442695
    %v1140 = vpow.pop %v1139
    %1143 = vset.pattern.permute.xlu0 0
    %1144 = vperm.xlu0 %1143, %v1138
    %v1145 = vpop.permute.xlu0 %1144
    %1146 = vset.pattern.permute.xlu0 0
    %1147 = vperm.xlu0 %1146, %v1140
    %v1148 = vpop.permute.xlu0 %1147
    %v1149 = vlaneseq
    %v1150 = vshrl.u32 %v1149, 7
    %v1151 = vsub.s32 %v896, %v1150
    %v1152 = vrot.slane %v1145, %v1151
    %v1153 = vlaneseq
    %v1154 = vshrl.u32 %v1153, 7
    %v1155 = vsub.s32 %v896, %v1154
    %v1156 = vrot.slane %v1148, %v1155
    %v1157 = vsel %vm921, %v1156, %v1152
    %v1159 = vsel %vm928, %v1157, 0.0
    %1160 = vadd.xlane.f32.xlu0 %v1159
    %v1161 = vpop.xlane.xlu0 %1160
    %v1162 = vlog2.pop %v1161
    %v1163 = vmul.f32 %v1162, 0.6931472
    %v1165 = vlaneseq
    %v1166 = vshrl.u32 %v1165, 7
    %v1167 = vsub.s32 0, %v1166
    %v1168 = vrot.slane %v1163, %v1167
    %v1169 = vlaneseq
    %v1170 = vshrl.u32 %v1169, 7
    %v1171 = vsub.s32 1, %v1170
    %v1172 = vrot.slane %v1163, %v1171
    %v1175 = vsub.f32 %v1135, %v1168
    %v1176 = vsub.f32 %v1136, %v1172
    %v1177 = vmul.f32 %v1175, 1.442695
    %v1178 = vpow.pop %v1177
    %v1179 = vmul.f32 %v1176, 1.442695
    %v1180 = vpow.pop %v1179
    %1182 = vset.pattern.permute.xlu0 0
    %1183 = vperm.xlu0 %1182, %v1098
    %v1184 = vpop.permute.xlu0 %1183
    %1187 = vset.pattern.permute.xlu0 0
    %1188 = vperm.xlu0 %1187, %v1100
    %v1189 = vpop.permute.xlu0 %1188
    %1192 = vset.pattern.permute.xlu0 0
    %1193 = vperm.xlu0 %1192, %v1102
    %v1194 = vpop.permute.xlu0 %1193
    %1197 = vset.pattern.permute.xlu0 0
    %1198 = vperm.xlu0 %1197, %v1104
    %v1199 = vpop.permute.xlu0 %1198
    %1202 = vset.pattern.permute.xlu0 0
    %1203 = vperm.xlu0 %1202, %v1106
    %v1204 = vpop.permute.xlu0 %1203
    %1207 = vset.pattern.permute.xlu0 0
    %1208 = vperm.xlu0 %1207, %v1108
    %v1209 = vpop.permute.xlu0 %1208
    %v1211 = vmul.f32 %v200, %v1184
    %v1212 = vmul.f32 %v201, %v1189
    %v1213 = vmul.f32 %v200, %v1194
    %v1214 = vmul.f32 %v201, %v1199
    %v1215 = vmul.f32 %v200, %v1204
    %v1216 = vmul.f32 %v201, %v1209
    %v1217 = vsel %vm213, %v1211, 0.0
    %v1218 = vrot.slane %v1217, 4
    %v1219 = vadd.f32 %v1217, %v1218
    %v1220 = vrot.slane %v1219, 2
    %v1221 = vadd.f32 %v1219, %v1220
    %v1222 = vrot.slane %v1221, 1
    %v1223 = vadd.f32 %v1221, %v1222
    %v1224 = vsel %vm213, %v1212, 0.0
    %v1225 = vrot.slane %v1224, 4
    %v1226 = vadd.f32 %v1224, %v1225
    %v1227 = vrot.slane %v1226, 2
    %v1228 = vadd.f32 %v1226, %v1227
    %v1229 = vrot.slane %v1228, 1
    %v1230 = vadd.f32 %v1228, %v1229
    %v1231 = vsel %vm213, %v1213, 0.0
    %v1232 = vrot.slane %v1231, 4
    %v1233 = vadd.f32 %v1231, %v1232
    %v1234 = vrot.slane %v1233, 2
    %v1235 = vadd.f32 %v1233, %v1234
    %v1236 = vrot.slane %v1235, 1
    %v1237 = vadd.f32 %v1235, %v1236
    %v1238 = vsel %vm213, %v1214, 0.0
    %v1239 = vrot.slane %v1238, 4
    %v1240 = vadd.f32 %v1238, %v1239
    %v1241 = vrot.slane %v1240, 2
    %v1242 = vadd.f32 %v1240, %v1241
    %v1243 = vrot.slane %v1242, 1
    %v1244 = vadd.f32 %v1242, %v1243
    %v1245 = vsel %vm213, %v1215, 0.0
    %v1246 = vrot.slane %v1245, 4
    %v1247 = vadd.f32 %v1245, %v1246
    %v1248 = vrot.slane %v1247, 2
    %v1249 = vadd.f32 %v1247, %v1248
    %v1250 = vrot.slane %v1249, 1
    %v1251 = vadd.f32 %v1249, %v1250
    %v1252 = vsel %vm213, %v1216, 0.0
    %v1253 = vrot.slane %v1252, 4
    %v1254 = vadd.f32 %v1252, %v1253
    %v1255 = vrot.slane %v1254, 2
    %v1256 = vadd.f32 %v1254, %v1255
    %v1257 = vrot.slane %v1256, 1
    %v1258 = vadd.f32 %v1256, %v1257
    %v1259 = vld [vmem:[%s17] sm:$0xff]
    %v1260 = vld [vmem:[%s17 + $0x8] sm:$0xff]
    %v1261 = vld [vmem:[%s17 + $0x10] sm:$0xff]
    %v1262 = vld [vmem:[%s17 + $0x18] sm:$0xff]
    %v1263 = vld [vmem:[#allocation18] sm:$0x1]
    %v1265 = vlaneseq
    %v1266 = vshrl.u32 %v1265, 7
    %v1267 = vsub.s32 0, %v1266
    %v1268 = vrot.slane %v1263, %v1267
    %v1276 = vsel %vm921, %v1230, %v1223
    %vm1277 = vcmask 1042434
    %v1278 = vsel %vm1277, %v1237, %v1276
    %vm1279 = vcmask 1043459
    %v1280 = vsel %vm1279, %v1244, %v1278
    %vm1281 = vcmask 1044484
    %v1282 = vsel %vm1281, %v1251, %v1280
    %vm1283 = vcmask 1045509
    %v1284 = vsel %vm1283, %v1258, %v1282
    %v1285 = vsel %vm213, %v1284, 0
    %1287 = vmatprep.subr.mxu0 0.0
    %1288 = vmatpush1.msra.mxu0 %v1259
    %1289 = vmatprep.subr.mxu0 0.0
    %1290 = vmatpush1.msra.mxu0 %v1260
    %1291 = vmatprep.subr.mxu0 0.0
    %1292 = vmatpush1.msra.mxu0 %v1261
    %1293 = vmatprep.subr.mxu0 0.0
    %1294 = vmatpush1.msra.mxu0 %v1262
    %1295 = vmatprep.subr.mxu0 0.0
    %1296 = vmatpush1.msra.mxu0 0.0
    %1297 = vmatprep.subr.mxu0 0.0
    %1298 = vmatpush1.msra.mxu0 0.0
    %1299 = vmatprep.subr.mxu0 0.0
    %1300 = vmatpush1.msra.mxu0 0.0
    %1301 = vmatprep.subr.mxu0 0.0
    %1302 = vmatpush1.msra.mxu0 0.0
    %1303 = vmatprep.subr.mxu0 0.0
    %1304 = vmatpush1.msra.mxu0 0.0
    %1305 = vmatprep.subr.mxu0 0.0
    %1306 = vmatpush1.msra.mxu0 0.0
    %1307 = vmatprep.subr.mxu0 0.0
    %1308 = vmatpush1.msra.mxu0 0.0
    %1309 = vmatprep.subr.mxu0 0.0
    %1310 = vmatpush1.msra.mxu0 0.0
    %1311 = vmatprep.subr.mxu0 0.0
    %1312 = vmatpush1.msra.mxu0 0.0
    %1313 = vmatprep.subr.mxu0 0.0
    %1314 = vmatpush1.msra.mxu0 0.0
    %1315 = vmatprep.subr.mxu0 0.0
    %1316 = vmatpush1.msra.mxu0 0.0
    %1317 = vmatprep.subr.mxu0 0.0
    %1318 = vmatpush1.msra.mxu0 0.0
    %1319 = vmatprep.subr.mxu0 0.0
    %1320 = vmatpush1.msra.mxu0 0.0
    %1321 = vmatprep.subr.mxu0 0.0
    %1322 = vmatpush1.msra.mxu0 0.0
    %1323 = vmatprep.subr.mxu0 0.0
    %1324 = vmatpush1.msra.mxu0 0.0
    %1325 = vmatprep.subr.mxu0 0.0
    %1326 = vmatpush1.msra.mxu0 0.0
    %1327 = vmatprep.subr.mxu0 0.0
    %1328 = vmatpush1.msra.mxu0 0.0
    %1329 = vmatprep.subr.mxu0 0.0
    %1330 = vmatpush1.msra.mxu0 0.0
    %1331 = vmatprep.subr.mxu0 0.0
    %1332 = vmatpush1.msra.mxu0 0.0
    %1333 = vmatprep.subr.mxu0 0.0
    %1334 = vmatpush1.msra.mxu0 0.0
    %1335 = vmatprep.subr.mxu0 0.0
    %1336 = vmatpush1.msra.mxu0 0.0
    %1337 = vmatprep.subr.mxu0 0.0
    %1338 = vmatpush1.msra.mxu0 0.0
    %1339 = vmatprep.subr.mxu0 0.0
    %1340 = vmatpush1.msra.mxu0 0.0
    %1341 = vmatprep.subr.mxu0 0.0
    %1342 = vmatpush1.msra.mxu0 0.0
    %1343 = vmatprep.subr.mxu0 0.0
    %1344 = vmatpush1.msra.mxu0 0.0
    %1345 = vmatprep.subr.mxu0 0.0
    %1346 = vmatpush1.msra.mxu0 0.0
    %1347 = vmatprep.subr.mxu0 0.0
    %1348 = vmatpush1.msra.mxu0 0.0
    %1349 = vmatprep.subr.mxu0 0.0
    %1350 = vmatpush1.msra.mxu0 0.0
    %1351 = vmatprep.mubr.f32.mxu0 0.0
    %1352 = vmatmul.mubr.f32.gmra.mrb[0].mxu0 %v1285
    %v1353 = vpop.f32.mrb[0].mxu0
    %v1354 = vadd.f32 %v1268, %v1353
    %v1355 = vpop.f32.mrb[0].mxu0
    %1356 = vdwg.mxu0
    %v1357 = vld [vmem:[%s3] sm:$0x3]
    %v1358 = vld [vmem:[%s3 + $0x2] sm:$0x3]
    %v1359 = vld [vmem:[%s3 + $0x4] sm:$0x3]
    %v1360 = vmax.f32 %v1354, 0.0
    %v1364 = vcombine.low %v1357, %v1358
    %v1366 = vunpack.c.l.s4 1983009808
    %v1367 = vunpack.c.0.s8 %v1366
    %v1368 = vlaneseq
    %v1369 = vshrl.u32 %v1368, 7
    %v1370 = vsub.s32 %v1367, %v1369
    %v1371 = vrot.slane %v1364, %v1370
    %v1373 = vunpack.c.l.s4 1983009808
    %v1374 = vunpack.c.0.s8 %v1373
    %v1375 = vlaneseq
    %v1376 = vshrl.u32 %v1375, 7
    %v1377 = vsub.s32 %v1374, %v1376
    %v1378 = vrot.slane %v1359, %v1377
    %v1379 = vcombine.low %v1371, %v1378
    %v1381 = vmul.f32 %v1354, %v1379
    %v1382 = vsub.f32 %v1360, %v1381
    %v1383 = vand.u32 2147483647, %v1354
    %v1384 = vsub.f32 0.0, %v1383
    %v1385 = vmul.f32 %v1384, 1.442695
    %v1386 = vpow.pop %v1385
    %v1387 = vadd.f32 %v1386, 1.0
    %v1388 = vlog2.pop %v1387
    %v1389 = vmul.f32 %v1388, 0.6931472
    %v1390 = vmul.f32 -0.5, %v1386
    %v1391 = vadd.f32 %v1390, 1.0
    %v1392 = vmul.f32 %v1391, %v1386
    %v1393 = vand.u32 2147483647, %v1386
    %vm1394 = vcmp.lt.f32.partialorder %v1393, 0.0004427343
    %v1395 = vsel %vm1394, %v1392, %v1389
    %v1396 = vadd.f32 %v1382, %v1395
    %vm1397 = vcmask 128000
    %v1398 = vsel %vm1397, %v1396, 0.0
    %1399 = vadd.xlane.f32.xlu0 %v1398
    %v1400 = vpop.xlane.xlu0 %1399
    %v1401 = vrcp.pop 16.0
    %v1402 = vmul.f32 %v1400, %v1401
    %v1405 = vunpack.c.l.s4 269488144
    %v1406 = vunpack.c.0.s8 %v1405
    %v1407 = vlaneseq
    %v1408 = vshrl.u32 %v1407, 7
    %v1409 = vsub.s32 %v1406, %v1408
    %v1410 = vrot.slane %v1402, %v1409
    %v1412 = vunpack.c.l.s4 842150450
    %v1413 = vunpack.c.0.s8 %v1412
    %v1414 = vlaneseq
    %v1415 = vshrl.u32 %v1414, 7
    %v1416 = vsub.s32 %v1413, %v1415
    %v1417 = vrot.slane %v1402, %v1416
    %v1419 = vunpack.c.l.s4 1414812756
    %v1420 = vunpack.c.0.s8 %v1419
    %v1421 = vlaneseq
    %v1422 = vshrl.u32 %v1421, 7
    %v1423 = vsub.s32 %v1420, %v1422
    %v1424 = vrot.slane %v1402, %v1423
    %v1428 = vld [vmem:[#allocation6] sm:$0xff]
    %v1429 = vld [vmem:[#allocation6 + $0x8] sm:$0xff]
    %v1430 = vld [vmem:[#allocation6 + $0x10] sm:$0xff]
    %v1431 = vld [vmem:[#allocation6 + $0x18] sm:$0xff]
    %v1432 = vld [vmem:[#allocation6 + $0x20] sm:$0xff]
    %v1433 = vld [vmem:[#allocation6 + $0x28] sm:$0xff]
    %v1434 = vld [vmem:[#allocation6 + $0x30] sm:$0xff]
    %v1435 = vld [vmem:[#allocation6 + $0x38] sm:$0xff]
    %v1436 = vld [vmem:[#allocation6 + $0x40] sm:$0xff]
    %v1437 = vld [vmem:[#allocation6 + $0x48] sm:$0xff]
    %v1438 = vld [vmem:[#allocation6 + $0x50] sm:$0xff]
    %v1439 = vld [vmem:[#allocation6 + $0x58] sm:$0xff]
    %v1440 = vld [vmem:[#allocation6 + $0x60] sm:$0xff]
    %v1441 = vld [vmem:[#allocation6 + $0x68] sm:$0xff]
    %v1442 = vld [vmem:[#allocation6 + $0x70] sm:$0xff]
    %v1443 = vld [vmem:[#allocation6 + $0x78] sm:$0xff]
    %v1444 = vld [vmem:[#allocation8] sm:$0xff]
    %v1445 = vld [vmem:[#allocation8 + $0x8] sm:$0xff]
    %v1446 = vld [vmem:[#allocation2] sm:$0x1]
    %s1447 = vtos %v1446
    %v1448 = vld [vmem:[%s4] sm:$0x3]
    %v1449 = vld [vmem:[%s4 + $0x2] sm:$0x3]
    %v1450 = vld [vmem:[%s4 + $0x4] sm:$0x3]
    %v1451 = vmul.f32 %v1410, %v1448
    %v1452 = vadd.f32 %v1451, 0.0
    %vm1453 = vcmask 64512
    %v1454 = vsel %vm1453, 1.0, 0.0
    %1455 = vadd.xlane.f32.xlu0 %v1454
    %v1456 = vpop.xlane.xlu0 %1455
    %v1457 = vlog2.pop %v1456
    %v1458 = vmul.f32 %v1457, 0.6931472
    %v1459 = vsub.f32 0.0, %v1458
    %v1460 = vsub.f32 %v1093, %v1459
    %v1461 = vsub.f32 %v1094, %v1459
    %v1462 = vmul.f32 %v1102, %v1460
    %v1463 = vmul.f32 %v1104, %v1461
    %1466 = vset.pattern.permute.xlu0 0
    %1467 = vperm.xlu0 %1466, %v1462
    %v1468 = vpop.permute.xlu0 %1467
    %1469 = vset.pattern.permute.xlu0 0
    %1470 = vperm.xlu0 %1469, %v1463
    %v1471 = vpop.permute.xlu0 %1470
    %v1472 = vlaneseq
    %v1473 = vshrl.u32 %v1472, 7
    %v1474 = vsub.s32 %v896, %v1473
    %v1475 = vrot.slane %v1468, %v1474
    %v1476 = vlaneseq
    %v1477 = vshrl.u32 %v1476, 7
    %v1478 = vsub.s32 %v896, %v1477
    %v1479 = vrot.slane %v1471, %v1478
    %v1480 = vsel %vm921, %v1479, %v1475
    %v1482 = vsel %vm928, %v1480, 0.0
    %1483 = vadd.xlane.f32.xlu0 %v1482
    %v1484 = vpop.xlane.xlu0 %1483
    %v1485 = vmul.f32 %v1484, 0.1
    %v1486 = vadd.f32 %v1417, %v1485
    %v1487 = vmul.f32 %v1486, %v1449
    %v1488 = vadd.f32 %v1452, %v1487
    %v1490 = vunpack.c.l.s4 1966171168
    %v1491 = vunpack.c.0.s8 %v1490
    %v1492 = vlaneseq
    %v1493 = vshrl.u32 %v1492, 7
    %v1494 = vsub.s32 %v1491, %v1493
    %v1495 = vrot.slane %v716, %v1494
    %v1496 = vcombine.high %v1495, %v1495
    %v1497 = vlaneseq
    %v1498 = vshrl.u32 %v1497, 7
    %v1499 = vsub.s32 0, %v1498
    %v1500 = vrot.slane %v1495, %v1499
    %v1501 = vlaneseq
    %v1502 = vshrl.u32 %v1501, 7
    %v1503 = vsub.s32 0, %v1502
    %v1504 = vrot.slane %v1496, %v1503
    %v1507 = vmul.f32 %v1428, %v1500
    %v1508 = vmul.f32 %v1429, %v1500
    %v1509 = vmul.f32 %v1430, %v1500
    %v1510 = vmul.f32 %v1431, %v1500
    %v1511 = vmul.f32 %v1432, %v1500
    %v1512 = vmul.f32 %v1433, %v1500
    %v1513 = vmul.f32 %v1434, %v1500
    %v1514 = vmul.f32 %v1435, %v1500
    %v1515 = vmul.f32 %v1436, %v1504
    %v1516 = vmul.f32 %v1437, %v1504
    %v1517 = vmul.f32 %v1438, %v1504
    %v1518 = vmul.f32 %v1439, %v1504
    %v1519 = vmul.f32 %v1440, %v1504
    %v1520 = vmul.f32 %v1441, %v1504
    %v1521 = vmul.f32 %v1442, %v1504
    %v1522 = vmul.f32 %v1443, %v1504
    %v1523 = vsel %vm1453, %v1507, 0.0
    %1524 = vadd.xlane.f32.xlu0 %v1523
    %v1525 = vpop.xlane.xlu0 %1524
    %v1526 = vsel %vm1453, %v1508, 0.0
    %1527 = vadd.xlane.f32.xlu0 %v1526
    %v1528 = vpop.xlane.xlu0 %1527
    %v1529 = vsel %vm1453, %v1509, 0.0
    %1530 = vadd.xlane.f32.xlu0 %v1529
    %v1531 = vpop.xlane.xlu0 %1530
    %v1532 = vsel %vm1453, %v1510, 0.0
    %1533 = vadd.xlane.f32.xlu0 %v1532
    %v1534 = vpop.xlane.xlu0 %1533
    %v1535 = vsel %vm1453, %v1511, 0.0
    %1536 = vadd.xlane.f32.xlu0 %v1535
    %v1537 = vpop.xlane.xlu0 %1536
    %v1538 = vsel %vm1453, %v1512, 0.0
    %1539 = vadd.xlane.f32.xlu0 %v1538
    %v1540 = vpop.xlane.xlu0 %1539
    %v1541 = vsel %vm1453, %v1513, 0.0
    %1542 = vadd.xlane.f32.xlu0 %v1541
    %v1543 = vpop.xlane.xlu0 %1542
    %v1544 = vsel %vm1453, %v1514, 0.0
    %1545 = vadd.xlane.f32.xlu0 %v1544
    %v1546 = vpop.xlane.xlu0 %1545
    %v1547 = vsel %vm1453, %v1515, 0.0
    %1548 = vadd.xlane.f32.xlu0 %v1547
    %v1549 = vpop.xlane.xlu0 %1548
    %v1550 = vsel %vm1453, %v1516, 0.0
    %1551 = vadd.xlane.f32.xlu0 %v1550
    %v1552 = vpop.xlane.xlu0 %1551
    %v1553 = vsel %vm1453, %v1517, 0.0
    %1554 = vadd.xlane.f32.xlu0 %v1553
    %v1555 = vpop.xlane.xlu0 %1554
    %v1556 = vsel %vm1453, %v1518, 0.0
    %1557 = vadd.xlane.f32.xlu0 %v1556
    %v1558 = vpop.xlane.xlu0 %1557
    %v1559 = vsel %vm1453, %v1519, 0.0
    %1560 = vadd.xlane.f32.xlu0 %v1559
    %v1561 = vpop.xlane.xlu0 %1560
    %v1562 = vsel %vm1453, %v1520, 0.0
    %1563 = vadd.xlane.f32.xlu0 %v1562
    %v1564 = vpop.xlane.xlu0 %1563
    %v1565 = vsel %vm1453, %v1521, 0.0
    %1566 = vadd.xlane.f32.xlu0 %v1565
    %v1567 = vpop.xlane.xlu0 %1566
    %v1568 = vsel %vm1453, %v1522, 0.0
    %1569 = vadd.xlane.f32.xlu0 %v1568
    %v1570 = vpop.xlane.xlu0 %1569
    %v1571 = vstv %s1447
    %v1572 = vadd.f32 %v1525, %v1571
    %v1573 = vadd.f32 %v1528, %v1571
    %v1574 = vadd.f32 %v1531, %v1571
    %v1575 = vadd.f32 %v1534, %v1571
    %v1576 = vadd.f32 %v1537, %v1571
    %v1577 = vadd.f32 %v1540, %v1571
    %v1578 = vadd.f32 %v1543, %v1571
    %v1579 = vadd.f32 %v1546, %v1571
    %v1580 = vadd.f32 %v1549, %v1571
    %v1581 = vadd.f32 %v1552, %v1571
    %v1582 = vadd.f32 %v1555, %v1571
    %v1583 = vadd.f32 %v1558, %v1571
    %v1584 = vadd.f32 %v1561, %v1571
    %v1585 = vadd.f32 %v1564, %v1571
    %v1586 = vadd.f32 %v1567, %v1571
    %v1587 = vadd.f32 %v1570, %v1571
    %vm1588 = vcmp.eq.f32.partialorder %v1444, 0.0
    %vm1589 = vcmp.eq.f32.partialorder %v1445, 0.0
    %v1606 = vlaneseq
    %v1607 = vshrl.u32 %v1606, 7
    %v1608 = vsub.s32 %v896, %v1607
    %v1609 = vrot.slane %v1572, %v1608
    %v1610 = vlaneseq
    %v1611 = vshrl.u32 %v1610, 7
    %v1612 = vsub.s32 %v896, %v1611
    %v1613 = vrot.slane %v1573, %v1612
    %v1614 = vlaneseq
    %v1615 = vshrl.u32 %v1614, 7
    %v1616 = vsub.s32 %v896, %v1615
    %v1617 = vrot.slane %v1574, %v1616
    %v1618 = vlaneseq
    %v1619 = vshrl.u32 %v1618, 7
    %v1620 = vsub.s32 %v896, %v1619
    %v1621 = vrot.slane %v1575, %v1620
    %v1622 = vlaneseq
    %v1623 = vshrl.u32 %v1622, 7
    %v1624 = vsub.s32 %v896, %v1623
    %v1625 = vrot.slane %v1576, %v1624
    %v1626 = vlaneseq
    %v1627 = vshrl.u32 %v1626, 7
    %v1628 = vsub.s32 %v896, %v1627
    %v1629 = vrot.slane %v1577, %v1628
    %v1630 = vlaneseq
    %v1631 = vshrl.u32 %v1630, 7
    %v1632 = vsub.s32 %v896, %v1631
    %v1633 = vrot.slane %v1578, %v1632
    %v1634 = vlaneseq
    %v1635 = vshrl.u32 %v1634, 7
    %v1636 = vsub.s32 %v896, %v1635
    %v1637 = vrot.slane %v1579, %v1636
    %v1638 = vlaneseq
    %v1639 = vshrl.u32 %v1638, 7
    %v1640 = vsub.s32 %v896, %v1639
    %v1641 = vrot.slane %v1580, %v1640
    %v1642 = vlaneseq
    %v1643 = vshrl.u32 %v1642, 7
    %v1644 = vsub.s32 %v896, %v1643
    %v1645 = vrot.slane %v1581, %v1644
    %v1646 = vlaneseq
    %v1647 = vshrl.u32 %v1646, 7
    %v1648 = vsub.s32 %v896, %v1647
    %v1649 = vrot.slane %v1582, %v1648
    %v1650 = vlaneseq
    %v1651 = vshrl.u32 %v1650, 7
    %v1652 = vsub.s32 %v896, %v1651
    %v1653 = vrot.slane %v1583, %v1652
    %v1654 = vlaneseq
    %v1655 = vshrl.u32 %v1654, 7
    %v1656 = vsub.s32 %v896, %v1655
    %v1657 = vrot.slane %v1584, %v1656
    %v1658 = vlaneseq
    %v1659 = vshrl.u32 %v1658, 7
    %v1660 = vsub.s32 %v896, %v1659
    %v1661 = vrot.slane %v1585, %v1660
    %v1662 = vlaneseq
    %v1663 = vshrl.u32 %v1662, 7
    %v1664 = vsub.s32 %v896, %v1663
    %v1665 = vrot.slane %v1586, %v1664
    %v1666 = vlaneseq
    %v1667 = vshrl.u32 %v1666, 7
    %v1668 = vsub.s32 %v896, %v1667
    %v1669 = vrot.slane %v1587, %v1668
    %v1670 = vsel %vm921, %v1613, %v1609
    %v1671 = vsel %vm1277, %v1617, %v1670
    %v1672 = vsel %vm1279, %v1621, %v1671
    %v1673 = vsel %vm1281, %v1625, %v1672
    %v1674 = vsel %vm1283, %v1629, %v1673
    %vm1675 = vcmask 1046534
    %v1676 = vsel %vm1675, %v1633, %v1674
    %vm1677 = vcmask 1047559
    %v1678 = vsel %vm1677, %v1637, %v1676
    %v1679 = vsel %vm921, %v1645, %v1641
    %v1680 = vsel %vm1277, %v1649, %v1679
    %v1681 = vsel %vm1279, %v1653, %v1680
    %v1682 = vsel %vm1281, %v1657, %v1681
    %v1683 = vsel %vm1283, %v1661, %v1682
    %v1684 = vsel %vm1675, %v1665, %v1683
    %v1685 = vsel %vm1677, %v1669, %v1684
    %v1688 = vsel %vm1588, -1e+12, %v1678
    %v1689 = vsel %vm1589, -1e+12, %v1685
    %v1690 = vsel %vm1453, %v1688, -inf
    %v1691 = vrot.slane %v1690, 4
    %v1692 = vmax.f32 %v1690, %v1691
    %v1693 = vrot.slane %v1692, 2
    %v1694 = vmax.f32 %v1692, %v1693
    %v1695 = vrot.slane %v1694, 1
    %v1696 = vmax.f32 %v1694, %v1695
    %v1697 = vsel %vm1453, %v1689, -inf
    %v1698 = vrot.slane %v1697, 4
    %v1699 = vmax.f32 %v1697, %v1698
    %v1700 = vrot.slane %v1699, 2
    %v1701 = vmax.f32 %v1699, %v1700
    %v1702 = vrot.slane %v1701, 1
    %v1703 = vmax.f32 %v1701, %v1702
    %v1704 = vsub.f32 %v1688, %v1696
    %v1705 = vsub.f32 %v1689, %v1703
    %v1706 = vmul.f32 %v1704, 1.442695
    %v1707 = vpow.pop %v1706
    %v1708 = vmul.f32 %v1705, 1.442695
    %v1709 = vpow.pop %v1708
    %v1710 = vsel %vm1453, %v1707, 0.0
    %v1711 = vrot.slane %v1710, 4
    %v1712 = vadd.f32 %v1710, %v1711
    %v1713 = vrot.slane %v1712, 2
    %v1714 = vadd.f32 %v1712, %v1713
    %v1715 = vrot.slane %v1714, 1
    %v1716 = vadd.f32 %v1714, %v1715
    %v1717 = vsel %vm1453, %v1709, 0.0
    %v1718 = vrot.slane %v1717, 4
    %v1719 = vadd.f32 %v1717, %v1718
    %v1720 = vrot.slane %v1719, 2
    %v1721 = vadd.f32 %v1719, %v1720
    %v1722 = vrot.slane %v1721, 1
    %v1723 = vadd.f32 %v1721, %v1722
    %v1724 = vrcp.pop %v1716
    %v1725 = vmul.f32 %v1707, %v1724
    %v1726 = vrcp.pop %v1723
    %v1727 = vmul.f32 %v1709, %v1726
    %v1728 = vsel %vm1277, %v900, %v900
    %v1729 = vsel %vm1279, %v900, %v1728
    %v1730 = vsel %vm1281, %v900, %v1729
    %v1731 = vsel %vm1283, %v900, %v1730
    %v1732 = vsel %vm1675, %v900, %v1731
    %v1733 = vsel %vm1677, %v900, %v1732
    %v1734 = vsel %vm1277, %v904, %v904
    %v1735 = vsel %vm1279, %v904, %v1734
    %v1736 = vsel %vm1281, %v904, %v1735
    %v1737 = vsel %vm1283, %v904, %v1736
    %v1738 = vsel %vm1675, %v904, %v1737
    %v1739 = vsel %vm1677, %v904, %v1738
    %v1742 = vmul.f32 %v1725, %v1733
    %v1743 = vmul.f32 %v1727, %v1739
    %v1744 = vsel %vm1453, %v1742, 0.0
    %1745 = vadd.xlane.f32.xlu0 %v1744
    %v1746 = vpop.xlane.xlu0 %1745
    %v1747 = vsel %vm1453, %v1743, 0.0
    %1748 = vadd.xlane.f32.xlu0 %v1747
    %v1749 = vpop.xlane.xlu0 %1748
    %v1752 = vlaneseq
    %v1753 = vshrl.u32 %v1752, 7
    %v1754 = vsub.s32 %v896, %v1753
    %v1755 = vrot.slane %v1746, %v1754
    %v1756 = vlaneseq
    %v1757 = vshrl.u32 %v1756, 7
    %v1758 = vsub.s32 %v896, %v1757
    %v1759 = vrot.slane %v1749, %v1758
    %v1760 = vsel %vm921, %v1759, %v1755
    %v1762 = vsel %vm928, %v1760, -inf
    %1763 = vmax.xlane.f32.xlu0 %v1762
    %v1764 = vpop.xlane.xlu0 %1763
    %v1766 = vlaneseq
    %v1767 = vshrl.u32 %v1766, 7
    %v1768 = vsub.s32 0, %v1767
    %v1769 = vrot.slane %v1764, %v1768
    %v1770 = vlaneseq
    %v1771 = vshrl.u32 %v1770, 7
    %v1772 = vsub.s32 1, %v1771
    %v1773 = vrot.slane %v1764, %v1772
    %v1776 = vsub.f32 %v1746, %v1769
    %v1777 = vsub.f32 %v1749, %v1773
    %v1778 = vmul.f32 %v1776, 1.442695
    %v1779 = vpow.pop %v1778
    %v1780 = vmul.f32 %v1777, 1.442695
    %v1781 = vpow.pop %v1780
    %1784 = vset.pattern.permute.xlu0 0
    %1785 = vperm.xlu0 %1784, %v1779
    %v1786 = vpop.permute.xlu0 %1785
    %1787 = vset.pattern.permute.xlu0 0
    %1788 = vperm.xlu0 %1787, %v1781
    %v1789 = vpop.permute.xlu0 %1788
    %v1790 = vlaneseq
    %v1791 = vshrl.u32 %v1790, 7
    %v1792 = vsub.s32 %v896, %v1791
    %v1793 = vrot.slane %v1786, %v1792
    %v1794 = vlaneseq
    %v1795 = vshrl.u32 %v1794, 7
    %v1796 = vsub.s32 %v896, %v1795
    %v1797 = vrot.slane %v1789, %v1796
    %v1798 = vsel %vm921, %v1797, %v1793
    %v1800 = vsel %vm928, %v1798, 0.0
    %1801 = vadd.xlane.f32.xlu0 %v1800
    %v1802 = vpop.xlane.xlu0 %1801
    %v1803 = vlog2.pop %v1802
    %v1804 = vmul.f32 %v1803, 0.6931472
    %v1806 = vlaneseq
    %v1807 = vshrl.u32 %v1806, 7
    %v1808 = vsub.s32 0, %v1807
    %v1809 = vrot.slane %v1804, %v1808
    %v1810 = vlaneseq
    %v1811 = vshrl.u32 %v1810, 7
    %v1812 = vsub.s32 1, %v1811
    %v1813 = vrot.slane %v1804, %v1812
    %v1816 = vsub.f32 %v1776, %v1809
    %v1817 = vsub.f32 %v1777, %v1813
    %v1818 = vsub.f32 %v1095, %v1816
    %v1819 = vsub.f32 %v1096, %v1817
    %v1820 = vmul.f32 %v1106, %v1818
    %v1821 = vmul.f32 %v1108, %v1819
    %1824 = vset.pattern.permute.xlu0 0
    %1825 = vperm.xlu0 %1824, %v1820
    %v1826 = vpop.permute.xlu0 %1825
    %1827 = vset.pattern.permute.xlu0 0
    %1828 = vperm.xlu0 %1827, %v1821
    %v1829 = vpop.permute.xlu0 %1828
    %v1830 = vlaneseq
    %v1831 = vshrl.u32 %v1830, 7
    %v1832 = vsub.s32 %v896, %v1831
    %v1833 = vrot.slane %v1826, %v1832
    %v1834 = vlaneseq
    %v1835 = vshrl.u32 %v1834, 7
    %v1836 = vsub.s32 %v896, %v1835
    %v1837 = vrot.slane %v1829, %v1836
    %v1838 = vsel %vm921, %v1837, %v1833
    %v1840 = vsel %vm928, %v1838, 0.0
    %1841 = vadd.xlane.f32.xlu0 %v1840
    %v1842 = vpop.xlane.xlu0 %1841
    %v1843 = vmul.f32 %v1842, 0.1
    %v1844 = vadd.f32 %v1424, %v1843
    %v1845 = vmul.f32 %v1844, %v1450
    %v1846 = vadd.f32 %v1488, %v1845
    %v1848 = vunpack.c.l.s4 1966171168
    %v1849 = vunpack.c.0.s8 %v1848
    %v1850 = vlaneseq
    %v1851 = vshrl.u32 %v1850, 7
    %v1852 = vsub.s32 %v1849, %v1851
    %v1853 = vrot.slane %v715, %v1852
    %v1854 = vcombine.high %v1853, %v1853
    %v1855 = vlaneseq
    %v1856 = vshrl.u32 %v1855, 7
    %v1857 = vsub.s32 0, %v1856
    %v1858 = vrot.slane %v1853, %v1857
    %v1859 = vlaneseq
    %v1860 = vshrl.u32 %v1859, 7
    %v1861 = vsub.s32 0, %v1860
    %v1862 = vrot.slane %v1854, %v1861
    %v1865 = vmul.f32 %v1428, %v1858
    %v1866 = vmul.f32 %v1429, %v1858
    %v1867 = vmul.f32 %v1430, %v1858
    %v1868 = vmul.f32 %v1431, %v1858
    %v1869 = vmul.f32 %v1432, %v1858
    %v1870 = vmul.f32 %v1433, %v1858
    %v1871 = vmul.f32 %v1434, %v1858
    %v1872 = vmul.f32 %v1435, %v1858
    %v1873 = vmul.f32 %v1436, %v1862
    %v1874 = vmul.f32 %v1437, %v1862
    %v1875 = vmul.f32 %v1438, %v1862
    %v1876 = vmul.f32 %v1439, %v1862
    %v1877 = vmul.f32 %v1440, %v1862
    %v1878 = vmul.f32 %v1441, %v1862
    %v1879 = vmul.f32 %v1442, %v1862
    %v1880 = vmul.f32 %v1443, %v1862
    %v1881 = vsel %vm1453, %v1865, 0.0
    %1882 = vadd.xlane.f32.xlu0 %v1881
    %v1883 = vpop.xlane.xlu0 %1882
    %v1884 = vsel %vm1453, %v1866, 0.0
    %1885 = vadd.xlane.f32.xlu0 %v1884
    %v1886 = vpop.xlane.xlu0 %1885
    %v1887 = vsel %vm1453, %v1867, 0.0
    %1888 = vadd.xlane.f32.xlu0 %v1887
    %v1889 = vpop.xlane.xlu0 %1888
    %v1890 = vsel %vm1453, %v1868, 0.0
    %1891 = vadd.xlane.f32.xlu0 %v1890
    %v1892 = vpop.xlane.xlu0 %1891
    %v1893 = vsel %vm1453, %v1869, 0.0
    %1894 = vadd.xlane.f32.xlu0 %v1893
    %v1895 = vpop.xlane.xlu0 %1894
    %v1896 = vsel %vm1453, %v1870, 0.0
    %1897 = vadd.xlane.f32.xlu0 %v1896
    %v1898 = vpop.xlane.xlu0 %1897
    %v1899 = vsel %vm1453, %v1871, 0.0
    %1900 = vadd.xlane.f32.xlu0 %v1899
    %v1901 = vpop.xlane.xlu0 %1900
    %v1902 = vsel %vm1453, %v1872, 0.0
    %1903 = vadd.xlane.f32.xlu0 %v1902
    %v1904 = vpop.xlane.xlu0 %1903
    %v1905 = vsel %vm1453, %v1873, 0.0
    %1906 = vadd.xlane.f32.xlu0 %v1905
    %v1907 = vpop.xlane.xlu0 %1906
    %v1908 = vsel %vm1453, %v1874, 0.0
    %1909 = vadd.xlane.f32.xlu0 %v1908
    %v1910 = vpop.xlane.xlu0 %1909
    %v1911 = vsel %vm1453, %v1875, 0.0
    %1912 = vadd.xlane.f32.xlu0 %v1911
    %v1913 = vpop.xlane.xlu0 %1912
    %v1914 = vsel %vm1453, %v1876, 0.0
    %1915 = vadd.xlane.f32.xlu0 %v1914
    %v1916 = vpop.xlane.xlu0 %1915
    %v1917 = vsel %vm1453, %v1877, 0.0
    %1918 = vadd.xlane.f32.xlu0 %v1917
    %v1919 = vpop.xlane.xlu0 %1918
    %v1920 = vsel %vm1453, %v1878, 0.0
    %1921 = vadd.xlane.f32.xlu0 %v1920
    %v1922 = vpop.xlane.xlu0 %1921
    %v1923 = vsel %vm1453, %v1879, 0.0
    %1924 = vadd.xlane.f32.xlu0 %v1923
    %v1925 = vpop.xlane.xlu0 %1924
    %v1926 = vsel %vm1453, %v1880, 0.0
    %1927 = vadd.xlane.f32.xlu0 %v1926
    %v1928 = vpop.xlane.xlu0 %1927
    %v1929 = vadd.f32 %v1883, %v1571
    %v1930 = vadd.f32 %v1886, %v1571
    %v1931 = vadd.f32 %v1889, %v1571
    %v1932 = vadd.f32 %v1892, %v1571
    %v1933 = vadd.f32 %v1895, %v1571
    %v1934 = vadd.f32 %v1898, %v1571
    %v1935 = vadd.f32 %v1901, %v1571
    %v1936 = vadd.f32 %v1904, %v1571
    %v1937 = vadd.f32 %v1907, %v1571
    %v1938 = vadd.f32 %v1910, %v1571
    %v1939 = vadd.f32 %v1913, %v1571
    %v1940 = vadd.f32 %v1916, %v1571
    %v1941 = vadd.f32 %v1919, %v1571
    %v1942 = vadd.f32 %v1922, %v1571
    %v1943 = vadd.f32 %v1925, %v1571
    %v1944 = vadd.f32 %v1928, %v1571
    %v1961 = vlaneseq
    %v1962 = vshrl.u32 %v1961, 7
    %v1963 = vsub.s32 %v896, %v1962
    %v1964 = vrot.slane %v1929, %v1963
    %v1965 = vlaneseq
    %v1966 = vshrl.u32 %v1965, 7
    %v1967 = vsub.s32 %v896, %v1966
    %v1968 = vrot.slane %v1930, %v1967
    %v1969 = vlaneseq
    %v1970 = vshrl.u32 %v1969, 7
    %v1971 = vsub.s32 %v896, %v1970
    %v1972 = vrot.slane %v1931, %v1971
    %v1973 = vlaneseq
    %v1974 = vshrl.u32 %v1973, 7
    %v1975 = vsub.s32 %v896, %v1974
    %v1976 = vrot.slane %v1932, %v1975
    %v1977 = vlaneseq
    %v1978 = vshrl.u32 %v1977, 7
    %v1979 = vsub.s32 %v896, %v1978
    %v1980 = vrot.slane %v1933, %v1979
    %v1981 = vlaneseq
    %v1982 = vshrl.u32 %v1981, 7
    %v1983 = vsub.s32 %v896, %v1982
    %v1984 = vrot.slane %v1934, %v1983
    %v1985 = vlaneseq
    %v1986 = vshrl.u32 %v1985, 7
    %v1987 = vsub.s32 %v896, %v1986
    %v1988 = vrot.slane %v1935, %v1987
    %v1989 = vlaneseq
    %v1990 = vshrl.u32 %v1989, 7
    %v1991 = vsub.s32 %v896, %v1990
    %v1992 = vrot.slane %v1936, %v1991
    %v1993 = vlaneseq
    %v1994 = vshrl.u32 %v1993, 7
    %v1995 = vsub.s32 %v896, %v1994
    %v1996 = vrot.slane %v1937, %v1995
    %v1997 = vlaneseq
    %v1998 = vshrl.u32 %v1997, 7
    %v1999 = vsub.s32 %v896, %v1998
    %v2000 = vrot.slane %v1938, %v1999
    %v2001 = vlaneseq
    %v2002 = vshrl.u32 %v2001, 7
    %v2003 = vsub.s32 %v896, %v2002
    %v2004 = vrot.slane %v1939, %v2003
    %v2005 = vlaneseq
    %v2006 = vshrl.u32 %v2005, 7
    %v2007 = vsub.s32 %v896, %v2006
    %v2008 = vrot.slane %v1940, %v2007
    %v2009 = vlaneseq
    %v2010 = vshrl.u32 %v2009, 7
    %v2011 = vsub.s32 %v896, %v2010
    %v2012 = vrot.slane %v1941, %v2011
    %v2013 = vlaneseq
    %v2014 = vshrl.u32 %v2013, 7
    %v2015 = vsub.s32 %v896, %v2014
    %v2016 = vrot.slane %v1942, %v2015
    %v2017 = vlaneseq
    %v2018 = vshrl.u32 %v2017, 7
    %v2019 = vsub.s32 %v896, %v2018
    %v2020 = vrot.slane %v1943, %v2019
    %v2021 = vlaneseq
    %v2022 = vshrl.u32 %v2021, 7
    %v2023 = vsub.s32 %v896, %v2022
    %v2024 = vrot.slane %v1944, %v2023
    %v2025 = vsel %vm921, %v1968, %v1964
    %v2026 = vsel %vm1277, %v1972, %v2025
    %v2027 = vsel %vm1279, %v1976, %v2026
    %v2028 = vsel %vm1281, %v1980, %v2027
    %v2029 = vsel %vm1283, %v1984, %v2028
    %v2030 = vsel %vm1675, %v1988, %v2029
    %v2031 = vsel %vm1677, %v1992, %v2030
    %v2032 = vsel %vm921, %v2000, %v1996
    %v2033 = vsel %vm1277, %v2004, %v2032
    %v2034 = vsel %vm1279, %v2008, %v2033
    %v2035 = vsel %vm1281, %v2012, %v2034
    %v2036 = vsel %vm1283, %v2016, %v2035
    %v2037 = vsel %vm1675, %v2020, %v2036
    %v2038 = vsel %vm1677, %v2024, %v2037
    %v2041 = vsel %vm1588, -1e+12, %v2031
    %v2042 = vsel %vm1589, -1e+12, %v2038
    %v2043 = vsel %vm1453, %v2041, -inf
    %v2044 = vrot.slane %v2043, 4
    %v2045 = vmax.f32 %v2043, %v2044
    %v2046 = vrot.slane %v2045, 2
    %v2047 = vmax.f32 %v2045, %v2046
    %v2048 = vrot.slane %v2047, 1
    %v2049 = vmax.f32 %v2047, %v2048
    %v2050 = vsel %vm1453, %v2042, -inf
    %v2051 = vrot.slane %v2050, 4
    %v2052 = vmax.f32 %v2050, %v2051
    %v2053 = vrot.slane %v2052, 2
    %v2054 = vmax.f32 %v2052, %v2053
    %v2055 = vrot.slane %v2054, 1
    %v2056 = vmax.f32 %v2054, %v2055
    %v2057 = vsub.f32 %v2041, %v2049
    %v2058 = vsub.f32 %v2042, %v2056
    %v2059 = vmul.f32 %v2057, 1.442695
    %v2060 = vpow.pop %v2059
    %v2061 = vmul.f32 %v2058, 1.442695
    %v2062 = vpow.pop %v2061
    %v2063 = vsel %vm1453, %v2060, 0.0
    %v2064 = vrot.slane %v2063, 4
    %v2065 = vadd.f32 %v2063, %v2064
    %v2066 = vrot.slane %v2065, 2
    %v2067 = vadd.f32 %v2065, %v2066
    %v2068 = vrot.slane %v2067, 1
    %v2069 = vadd.f32 %v2067, %v2068
    %v2070 = vsel %vm1453, %v2062, 0.0
    %v2071 = vrot.slane %v2070, 4
    %v2072 = vadd.f32 %v2070, %v2071
    %v2073 = vrot.slane %v2072, 2
    %v2074 = vadd.f32 %v2072, %v2073
    %v2075 = vrot.slane %v2074, 1
    %v2076 = vadd.f32 %v2074, %v2075
    %v2077 = vrcp.pop %v2069
    %v2078 = vmul.f32 %v2060, %v2077
    %v2079 = vrcp.pop %v2076
    %v2080 = vmul.f32 %v2062, %v2079
    %v2081 = vsel %vm1277, %v908, %v908
    %v2082 = vsel %vm1279, %v908, %v2081
    %v2083 = vsel %vm1281, %v908, %v2082
    %v2084 = vsel %vm1283, %v908, %v2083
    %v2085 = vsel %vm1675, %v908, %v2084
    %v2086 = vsel %vm1677, %v908, %v2085
    %v2087 = vsel %vm1277, %v912, %v912
    %v2088 = vsel %vm1279, %v912, %v2087
    %v2089 = vsel %vm1281, %v912, %v2088
    %v2090 = vsel %vm1283, %v912, %v2089
    %v2091 = vsel %vm1675, %v912, %v2090
    %v2092 = vsel %vm1677, %v912, %v2091
    %v2095 = vmul.f32 %v2078, %v2086
    %v2096 = vmul.f32 %v2080, %v2092
    %v2097 = vsel %vm1453, %v2095, 0.0
    %2098 = vadd.xlane.f32.xlu0 %v2097
    %v2099 = vpop.xlane.xlu0 %2098
    %v2100 = vsel %vm1453, %v2096, 0.0
    %2101 = vadd.xlane.f32.xlu0 %v2100
    %v2102 = vpop.xlane.xlu0 %2101
    %v2105 = vlaneseq
    %v2106 = vshrl.u32 %v2105, 7
    %v2107 = vsub.s32 %v896, %v2106
    %v2108 = vrot.slane %v2099, %v2107
    %v2109 = vlaneseq
    %v2110 = vshrl.u32 %v2109, 7
    %v2111 = vsub.s32 %v896, %v2110
    %v2112 = vrot.slane %v2102, %v2111
    %v2113 = vsel %vm921, %v2112, %v2108
    %v2115 = vsel %vm928, %v2113, -inf
    %2116 = vmax.xlane.f32.xlu0 %v2115
    %v2117 = vpop.xlane.xlu0 %2116
    %v2119 = vlaneseq
    %v2120 = vshrl.u32 %v2119, 7
    %v2121 = vsub.s32 0, %v2120
    %v2122 = vrot.slane %v2117, %v2121
    %v2123 = vlaneseq
    %v2124 = vshrl.u32 %v2123, 7
    %v2125 = vsub.s32 1, %v2124
    %v2126 = vrot.slane %v2117, %v2125
    %v2129 = vsub.f32 %v2099, %v2122
    %v2130 = vsub.f32 %v2102, %v2126
    %v2131 = vmul.f32 %v2129, 1.442695
    %v2132 = vpow.pop %v2131
    %v2133 = vmul.f32 %v2130, 1.442695
    %v2134 = vpow.pop %v2133
    %2137 = vset.pattern.permute.xlu0 0
    %2138 = vperm.xlu0 %2137, %v2132
    %v2139 = vpop.permute.xlu0 %2138
    %2140 = vset.pattern.permute.xlu0 0
    %2141 = vperm.xlu0 %2140, %v2134
    %v2142 = vpop.permute.xlu0 %2141
    %v2143 = vlaneseq
    %v2144 = vshrl.u32 %v2143, 7
    %v2145 = vsub.s32 %v896, %v2144
    %v2146 = vrot.slane %v2139, %v2145
    %v2147 = vlaneseq
    %v2148 = vshrl.u32 %v2147, 7
    %v2149 = vsub.s32 %v896, %v2148
    %v2150 = vrot.slane %v2142, %v2149
    %v2151 = vsel %vm921, %v2150, %v2146
    %v2153 = vsel %vm928, %v2151, 0.0
    %2154 = vadd.xlane.f32.xlu0 %v2153
    %v2155 = vpop.xlane.xlu0 %2154
    %v2156 = vlog2.pop %v2155
    %v2157 = vmul.f32 %v2156, 0.6931472
    %v2159 = vlaneseq
    %v2160 = vshrl.u32 %v2159, 7
    %v2161 = vsub.s32 0, %v2160
    %v2162 = vrot.slane %v2157, %v2161
    %v2163 = vlaneseq
    %v2164 = vshrl.u32 %v2163, 7
    %v2165 = vsub.s32 1, %v2164
    %v2166 = vrot.slane %v2157, %v2165
    %v2169 = vsub.f32 %v2129, %v2162
    %v2170 = vsub.f32 %v2130, %v2166
    %v2171 = vsub.f32 %v1175, %v2169
    %v2172 = vsub.f32 %v1176, %v2170
    %v2173 = vmul.f32 %v1178, %v2171
    %v2174 = vmul.f32 %v1180, %v2172
    %2177 = vset.pattern.permute.xlu0 0
    %2178 = vperm.xlu0 %2177, %v2173
    %v2179 = vpop.permute.xlu0 %2178
    %2180 = vset.pattern.permute.xlu0 0
    %2181 = vperm.xlu0 %2180, %v2174
    %v2182 = vpop.permute.xlu0 %2181
    %v2183 = vlaneseq
    %v2184 = vshrl.u32 %v2183, 7
    %v2185 = vsub.s32 %v896, %v2184
    %v2186 = vrot.slane %v2179, %v2185
    %v2187 = vlaneseq
    %v2188 = vshrl.u32 %v2187, 7
    %v2189 = vsub.s32 %v896, %v2188
    %v2190 = vrot.slane %v2182, %v2189
    %v2191 = vsel %vm921, %v2190, %v2186
    %v2193 = vsel %vm928, %v2191, 0.0
    %2194 = vadd.xlane.f32.xlu0 %v2193
    %v2195 = vpop.xlane.xlu0 %2194
    %v2196 = vmul.f32 %v2195, 0.1
    %v2197 = vadd.f32 %v1846, %v2196
    %vm2198 = vcmask 1024
    %v2199 = vsel %vm2198, %v2197, 0.0
    %v2200 = vrot.slane %v2199, 4
    %v2201 = vadd.f32 %v2199, %v2200
    %v2202 = vrot.slane %v2201, 2
    %v2203 = vadd.f32 %v2201, %v2202
    %v2204 = vrot.slane %v2203, 1
    %v2205 = vadd.f32 %v2203, %v2204
    %v2206 = vmul.f32 %v2205, 0.5
    %vm2207 = vcmask 0
    %2208 = vst.msk [vmem:[#allocation20] sm:$0x1] %vm2207, %v2206
    %2210 = vset.pattern.permute.xlu0 0
    %2211 = vperm.xlu0 %2210, %v1178
    %v2212 = vpop.permute.xlu0 %2211
    %2215 = vset.pattern.permute.xlu0 0
    %2216 = vperm.xlu0 %2215, %v1180
    %v2217 = vpop.permute.xlu0 %2216
    %v2219 = vmul.f32 %v200, %v2212
    %v2220 = vmul.f32 %v201, %v2217
    %v2221 = vsel %vm213, %v2219, 0.0
    %v2222 = vrot.slane %v2221, 4
    %v2223 = vadd.f32 %v2221, %v2222
    %v2224 = vrot.slane %v2223, 2
    %v2225 = vadd.f32 %v2223, %v2224
    %v2226 = vrot.slane %v2225, 1
    %v2227 = vadd.f32 %v2225, %v2226
    %v2228 = vsel %vm213, %v2220, 0.0
    %v2229 = vrot.slane %v2228, 4
    %v2230 = vadd.f32 %v2228, %v2229
    %v2231 = vrot.slane %v2230, 2
    %v2232 = vadd.f32 %v2230, %v2231
    %v2233 = vrot.slane %v2232, 1
    %v2234 = vadd.f32 %v2232, %v2233
    %v2237 = vsel %vm921, %v2234, %v2227
    %vm2239 = vcmask 254976
    %2240 = vst.msk [vmem:[#allocation21] sm:$0x3] %vm2239, %v2237
    // Predicated region
    $region118: #{time_reasoning_forward.1} parent=1 // pred_check
      _
    $region119: #{time_reasoning_forward.1} parent=1 // pred_check_branch
      %2242 = sbr.rel (0) target = $region121
    $region120: #{time_reasoning_forward.1} parent=1 // pred_region
      %s2244 = ssub.s32 16, 16
      %2245 = vsyncadd [#allocation5], %s2244
      %s2247 = sshll.u32 [#allocation20], 4
      %s2248 = int_to_ptr.vmem [resolvable:$true] %s2247
      %2250 = dma.vmem_to_hbm [thread:$0]  %s2248, 16, %s19, [#allocation5]
    $region121: #{time_reasoning_forward.1} parent=1 // pred_fallthru
      _
    // Predicated region
    $region122: #{time_reasoning_forward.1} parent=1 // pred_check
      _
    $region123: #{time_reasoning_forward.1} parent=1 // pred_check_branch
      %2252 = sbr.rel (0) target = $region125
    $region124: #{time_reasoning_forward.1} parent=1 // pred_region
      %s2254 = ssub.s32 32, 32
      %2255 = vsyncadd [#allocation22], %s2254
      %s2257 = sshll.u32 [#allocation21], 4
      %s2258 = int_to_ptr.vmem [resolvable:$true] %s2257
      %2260 = dma.vmem_to_hbm [thread:$0]  %s2258, 32, %s20, [#allocation22]
    $region125: #{time_reasoning_forward.1} parent=1 // pred_fallthru
      _
    // Predicated region
    $region126: #{time_reasoning_forward.1} parent=1 // pred_check
      _
    $region127: #{time_reasoning_forward.1} parent=1 // pred_check_branch
      %2262 = sbr.rel (0) target = $region129
    $region128: #{time_reasoning_forward.1} parent=1 // pred_region
      %2263 = dma.done [#allocation5], 16
    $region129: #{time_reasoning_forward.1} parent=1 // pred_fallthru
      _
    // Predicated region
    $region130: #{time_reasoning_forward.1} parent=1 // pred_check
      _
    $region131: #{time_reasoning_forward.1} parent=1 // pred_check_branch
      %2265 = sbr.rel (0) target = $region133
    $region132: #{time_reasoning_forward.1} parent=1 // pred_region
      %2266 = dma.done [#allocation22], 32
    $region133: #{time_reasoning_forward.1} parent=1 // pred_fallthru
      _
    %2267 = vsyncpa [#allocation4], 1
    %2268 = vsyncpa [#allocation7], 1
    %2269 = vsyncpa [#allocation10], 1
    %2270 = vsyncpa [#allocation13], 1
    %2271 = vsyncpa [#allocation16], 1
    %2272 = vsyncpa [#allocation19], 1
    %2273 = vsyncpa [#allocation5], 1
    %2274 = vsyncpa [#allocation22], 1

</llo_original>
